<compile_context>
chip_gen: v7x
topology: tpu7x:2x2x1
jax: 0.10.0
libtpu: 0.0.40
codegen_flags: <defaults>
</compile_context>

<pallas_src>
import functools
import math

import jax
import jax.numpy as jnp
from jax import lax
from jax.experimental import pallas as pl
from jax.experimental.pallas import tpu as pltpu


def _attention_kernel(x_ref, mask_ref, inw_ref, inb_ref, owt_ref, ob_ref,
                      g_ref, beta_ref, o_ref, *, d_model, nhead):
    """Fused self-attention + residual + LayerNorm over the whole (B*L, E) tile.

    x_ref    : (B*L, E)    rows are (batch, seq) flattened
    mask_ref : (B*L, B*L)  additive mask: 0 within a batch block, -1e30 across batches
    inw_ref  : (3E, E)     in_proj_weight (rows: [Wq; Wk; Wv])
    inb_ref  : (1, 3E)     in_proj_bias
    owt_ref  : (E, E)      out_proj.weight TRANSPOSED (rows indexed by attn feature)
    ob_ref   : (1, E)      out_proj.bias
    g_ref    : (1, E)      LayerNorm weight
    beta_ref : (1, E)      LayerNorm bias
    o_ref    : (B*L, E)
    """
    E = d_model
    hd = E // nhead
    scale = 1.0 / math.sqrt(hd)
    dn = (((1,), (1,)), ((), ()))  # contract last dims of both: a @ b.T, no transpose

    x = x_ref[...]                                    # (BL, E)
    neg = mask_ref[...]                               # (BL, BL)
    owt = owt_ref[...]                                # (E, E)

    # Fused QKV projection: one MXU weight push + one bias add instead of three.
    qkv = lax.dot_general(x, inw_ref[...], dn,
                          preferred_element_type=jnp.float32) + inb_ref[...]  # (BL, 3E)
    q = qkv[:, 0:E] * scale                           # scale hoisted onto q once
    k = qkv[:, E:2 * E]
    v = qkv[:, 2 * E:3 * E]

    # Per-head attention; accumulate each head straight into the output projection
    # (rows h*hd:(h+1)*hd of W_o^T), so no lane-wise concat of head outputs.
    proj = None
    for h in range(nhead):
        sl = slice(h * hd, (h + 1) * hd)
        qh, kh, vh = q[:, sl], k[:, sl], v[:, sl]                       # (BL, hd)
        s = lax.dot_general(qh, kh, dn,
                            preferred_element_type=jnp.float32) + neg   # (BL, BL)
        s = s - jnp.max(s, axis=-1, keepdims=True)
        p = jnp.exp(s)
        p = p * pl.reciprocal(jnp.sum(p, axis=-1, keepdims=True), approx=False)
        oh = jnp.dot(p, vh, preferred_element_type=jnp.float32)         # (BL, hd)
        contrib = jnp.dot(oh, owt[sl, :],
                          preferred_element_type=jnp.float32)           # (BL, E)
        proj = contrib if proj is None else proj + contrib

    # residual + LayerNorm (eps = 1e-5, biased variance, like torch.nn.LayerNorm)
    y = x + proj + ob_ref[...]
    mean = jnp.mean(y, axis=-1, keepdims=True)
    var = jnp.mean((y - mean) ** 2, axis=-1, keepdims=True)
    yn = (y - mean) * lax.rsqrt(var + 1e-5)
    o_ref[...] = yn * g_ref[...] + beta_ref[...]


def attention_forward(x_lbe, params, *, nhead):
    """x_lbe: (L, B, E) float32 -> (L, B, E) float32."""
    L, B, E = x_lbe.shape
    BL = B * L
    x2d = jnp.transpose(x_lbe, (1, 0, 2)).reshape(BL, E)     # (B*L, E), batch-major rows

    in_w = params["in_proj_weight"]                           # (3E, E)
    in_b = params["in_proj_bias"].reshape(1, 3 * E)
    out_wt = params["out_proj_weight"].T                      # (E, E) attn-feature-major
    out_b = params["out_proj_bias"].reshape(1, E)
    gamma = params["ln_weight"].reshape(1, E)
    beta = params["ln_bias"].reshape(1, E)

    # Additive block-diagonal mask so merged (B*L) rows never attend across batches.
    bid = jnp.repeat(jnp.arange(B, dtype=jnp.int32), L)       # (BL,)
    mask = jnp.where(bid[:, None] == bid[None, :], 0.0, -1e30).astype(jnp.float32)

    kernel = functools.partial(_attention_kernel, d_model=E, nhead=nhead)

    out2d = pl.pallas_call(
        kernel,
        out_shape=jax.ShapeDtypeStruct((BL, E), jnp.float32),
        grid_spec=pltpu.PrefetchScalarGridSpec(
            num_scalar_prefetch=0,
            grid=(1,),   # whole batch in one step (per-step overhead paid once)
            in_specs=[
                pl.BlockSpec((BL, E), lambda i: (0, 0)),
                pl.BlockSpec((BL, BL), lambda i: (0, 0)),
                pl.BlockSpec((3 * E, E), lambda i: (0, 0)),
                pl.BlockSpec((1, 3 * E), lambda i: (0, 0)),
                pl.BlockSpec((E, E), lambda i: (0, 0)),
                pl.BlockSpec((1, E), lambda i: (0, 0)),
                pl.BlockSpec((1, E), lambda i: (0, 0)),
                pl.BlockSpec((1, E), lambda i: (0, 0)),
            ],
            out_specs=pl.BlockSpec((BL, E), lambda i: (0, 0)),
        ),
        compiler_params=pltpu.CompilerParams(
            dimension_semantics=("arbitrary",)),
    )(x2d, mask, in_w, in_b, out_wt, out_b, gamma, beta)

    return jnp.transpose(out2d.reshape(B, L, E), (1, 0, 2))   # back to (L, B, E)


def attention_reference(x_lbe, params, *, nhead):
    """Pure-JAX reference replicating torch.nn.MultiheadAttention + LayerNorm."""
    L, B, E = x_lbe.shape
    hd = E // nhead
    x = jnp.transpose(x_lbe, (1, 0, 2))                       # (B, L, E)
    w = params["in_proj_weight"]
    b = params["in_proj_bias"]
    q = x @ w[:E].T + b[:E]
    k = x @ w[E:2 * E].T + b[E:2 * E]
    v = x @ w[2 * E:].T + b[2 * E:]

    def split(t):  # (B, L, E) -> (B, H, L, hd)
        return jnp.transpose(t.reshape(B, L, nhead, hd), (0, 2, 1, 3))

    qh, kh, vh = split(q), split(k), split(v)
    s = jnp.einsum("bhqd,bhkd->bhqk", qh, kh) / math.sqrt(hd)
    p = jax.nn.softmax(s, axis=-1)
    o = jnp.einsum("bhqk,bhkd->bhqd", p, vh)
    o = jnp.transpose(o, (0, 2, 1, 3)).reshape(B, L, E)
    o = o @ params["out_proj_weight"].T + params["out_proj_bias"]
    y = x + o
    mean = jnp.mean(y, axis=-1, keepdims=True)
    var = jnp.mean((y - mean) ** 2, axis=-1, keepdims=True)
    yn = (y - mean) / jnp.sqrt(var + 1e-5)
    out = yn * params["ln_weight"] + params["ln_bias"]
    return jnp.transpose(out, (1, 0, 2))


def init_params(key, d_model):
    k1, k2, k3, k4 = jax.random.split(key, 4)
    return {
        "in_proj_weight": jax.random.normal(k1, (3 * d_model, d_model), jnp.float32)
        * (1.0 / math.sqrt(d_model)),
        "in_proj_bias": jax.random.normal(k2, (3 * d_model,), jnp.float32) * 0.02,
        "out_proj_weight": jax.random.normal(k3, (d_model, d_model), jnp.float32)
        * (1.0 / math.sqrt(d_model)),
        "out_proj_bias": jax.random.normal(k4, (d_model,), jnp.float32) * 0.02,
        "ln_weight": jnp.ones((d_model,), jnp.float32),
        "ln_bias": jnp.zeros((d_model,), jnp.float32),
    }


if __name__ == "__main__":
    L, B, E, H = 8, 2, 32, 4  # seq, batch, d_model, nhead
    key = jax.random.PRNGKey(0)
    kx, kp = jax.random.split(key)
    x = jax.random.normal(kx, (L, B, E), jnp.float32)
    params = init_params(kp, E)

    out = attention_forward(x, params, nhead=H)
    out = jax.block_until_ready(out)

    ref = attention_reference(x, params, nhead=H)
    assert out.shape == (L, B, E)
    assert jnp.allclose(out, ref, rtol=1e-4, atol=1e-4), "mismatch vs reference"
    print("KERNEL_OK")
</pallas_src>

<mosaic_0001>
module attributes {stable_mosaic.version = 11 : i64} {
  func.func @_attention_kernel(%arg0: i32, %arg1: memref<16x32xf32, #tpu.memory_space<vmem>>, %arg2: memref<16x16xf32, #tpu.memory_space<vmem>>, %arg3: memref<96x32xf32, #tpu.memory_space<vmem>>, %arg4: memref<1x96xf32, #tpu.memory_space<vmem>>, %arg5: memref<32x32xf32, #tpu.memory_space<vmem>>, %arg6: memref<1x32xf32, #tpu.memory_space<vmem>>, %arg7: memref<1x32xf32, #tpu.memory_space<vmem>>, %arg8: memref<1x32xf32, #tpu.memory_space<vmem>>, %arg9: memref<16x32xf32, #tpu.memory_space<vmem>>) attributes {dimension_semantics = [#tpu.dimension_semantics<arbitrary>], iteration_bounds = array<i64: 1>, scalar_prefetch = 0 : i64, scratch_operands = 0 : i64, tpu.core_type = #tpu.core_type<tc>, window_params = [{pipeline_mode = #tpu.pipeline_mode<synchronous>, transform_indices = @transform_0, window_bounds = array<i64: 16, 32>}, {pipeline_mode = #tpu.pipeline_mode<synchronous>, transform_indices = @transform_1, window_bounds = array<i64: 16, 16>}, {pipeline_mode = #tpu.pipeline_mode<synchronous>, transform_indices = @transform_2, window_bounds = array<i64: 96, 32>}, {pipeline_mode = #tpu.pipeline_mode<synchronous>, transform_indices = @transform_3, window_bounds = array<i64: 1, 96>}, {pipeline_mode = #tpu.pipeline_mode<synchronous>, transform_indices = @transform_4, window_bounds = array<i64: 32, 32>}, {pipeline_mode = #tpu.pipeline_mode<synchronous>, transform_indices = @transform_5, window_bounds = array<i64: 1, 32>}, {pipeline_mode = #tpu.pipeline_mode<synchronous>, transform_indices = @transform_6, window_bounds = array<i64: 1, 32>}, {pipeline_mode = #tpu.pipeline_mode<synchronous>, transform_indices = @transform_7, window_bounds = array<i64: 1, 32>}, {pipeline_mode = #tpu.pipeline_mode<synchronous>, transform_indices = @transform_8, window_bounds = array<i64: 16, 32>}]} {
    %c0 = arith.constant 0 : index
    %c0_0 = arith.constant 0 : index
    %0 = vector.load %arg1[%c0, %c0_0] : memref<16x32xf32, #tpu.memory_space<vmem>>, vector<16x32xf32>
    %c0_1 = arith.constant 0 : index
    %c0_2 = arith.constant 0 : index
    %1 = vector.load %arg2[%c0_1, %c0_2] : memref<16x16xf32, #tpu.memory_space<vmem>>, vector<16x16xf32>
    %c0_3 = arith.constant 0 : index
    %c0_4 = arith.constant 0 : index
    %2 = vector.load %arg5[%c0_3, %c0_4] : memref<32x32xf32, #tpu.memory_space<vmem>>, vector<32x32xf32>
    %c0_5 = arith.constant 0 : index
    %c0_6 = arith.constant 0 : index
    %3 = vector.load %arg3[%c0_5, %c0_6] : memref<96x32xf32, #tpu.memory_space<vmem>>, vector<96x32xf32>
    %cst = arith.constant dense<0.000000e+00> : vector<16x96xf32>
    %4 = tpu.matmul %0, %3, %cst {dimension_numbers = #tpu.dot_dimension_numbers<[1], [1], [0], [0], [0, 0, 1, 0], [], []>} : vector<16x32xf32>, vector<96x32xf32>, vector<16x96xf32> -> vector<16x96xf32>
    %c0_7 = arith.constant 0 : index
    %c0_8 = arith.constant 0 : index
    %5 = vector.load %arg4[%c0_7, %c0_8] : memref<1x96xf32, #tpu.memory_space<vmem>>, vector<1x96xf32>
    %6 = vector.broadcast %5 : vector<1x96xf32> to vector<16x96xf32>
    %7 = arith.addf %4, %6 : vector<16x96xf32>
    %8 = vector.extract_strided_slice %7 {offsets = [0, 0], sizes = [16, 32], strides = [1, 1]} : vector<16x96xf32> to vector<16x32xf32>
    %cst_9 = arith.constant 0.353553385 : f32
    %9 = vector.broadcast %cst_9 : f32 to vector<16x32xf32>
    %10 = arith.mulf %8, %9 : vector<16x32xf32>
    %11 = vector.extract_strided_slice %7 {offsets = [0, 32], sizes = [16, 32], strides = [1, 1]} : vector<16x96xf32> to vector<16x32xf32>
    %12 = vector.extract_strided_slice %7 {offsets = [0, 64], sizes = [16, 32], strides = [1, 1]} : vector<16x96xf32> to vector<16x32xf32>
    %13 = vector.extract_strided_slice %10 {offsets = [0, 0], sizes = [16, 8], strides = [1, 1]} : vector<16x32xf32> to vector<16x8xf32>
    %14 = vector.extract_strided_slice %11 {offsets = [0, 0], sizes = [16, 8], strides = [1, 1]} : vector<16x32xf32> to vector<16x8xf32>
    %15 = vector.extract_strided_slice %12 {offsets = [0, 0], sizes = [16, 8], strides = [1, 1]} : vector<16x32xf32> to vector<16x8xf32>
    %cst_10 = arith.constant dense<0.000000e+00> : vector<16x16xf32>
    %16 = tpu.matmul %13, %14, %cst_10 {dimension_numbers = #tpu.dot_dimension_numbers<[1], [1], [0], [0], [0, 0, 1, 0], [], []>} : vector<16x8xf32>, vector<16x8xf32>, vector<16x16xf32> -> vector<16x16xf32>
    %17 = arith.addf %16, %1 : vector<16x16xf32>
    %cst_11 = arith.constant dense<0xFF800000> : vector<16xf32>
    %18 = vector.multi_reduction <maximumf>, %17, %cst_11 [1] : vector<16x16xf32> to vector<16xf32>
    %19 = vector.shape_cast %18 : vector<16xf32> to vector<16x1xf32>
    %20 = vector.broadcast %19 : vector<16x1xf32> to vector<16x16xf32>
    %21 = arith.subf %17, %20 : vector<16x16xf32>
    %22 = math.exp %21 : vector<16x16xf32>
    %cst_12 = arith.constant dense<0.000000e+00> : vector<16xf32>
    %23 = vector.multi_reduction <add>, %22, %cst_12 [1] : vector<16x16xf32> to vector<16xf32>
    %24 = vector.shape_cast %23 : vector<16xf32> to vector<16x1xf32>
    %25 = tpu.reciprocal %24 : vector<16x1xf32> -> vector<16x1xf32>
    %26 = vector.broadcast %25 : vector<16x1xf32> to vector<16x16xf32>
    %27 = arith.mulf %22, %26 : vector<16x16xf32>
    %cst_13 = arith.constant dense<0.000000e+00> : vector<16x8xf32>
    %28 = tpu.matmul %27, %15, %cst_13 {dimension_numbers = #tpu.dot_dimension_numbers<[1], [0], [0], [1], [0, 0, 1, 1], [], []>} : vector<16x16xf32>, vector<16x8xf32>, vector<16x8xf32> -> vector<16x8xf32>
    %29 = vector.extract_strided_slice %2 {offsets = [0, 0], sizes = [8, 32], strides = [1, 1]} : vector<32x32xf32> to vector<8x32xf32>
    %cst_14 = arith.constant dense<0.000000e+00> : vector<16x32xf32>
    %30 = tpu.matmul %28, %29, %cst_14 {dimension_numbers = #tpu.dot_dimension_numbers<[1], [0], [0], [1], [0, 0, 1, 1], [], []>} : vector<16x8xf32>, vector<8x32xf32>, vector<16x32xf32> -> vector<16x32xf32>
    %31 = vector.extract_strided_slice %10 {offsets = [0, 8], sizes = [16, 8], strides = [1, 1]} : vector<16x32xf32> to vector<16x8xf32>
    %32 = vector.extract_strided_slice %11 {offsets = [0, 8], sizes = [16, 8], strides = [1, 1]} : vector<16x32xf32> to vector<16x8xf32>
    %33 = vector.extract_strided_slice %12 {offsets = [0, 8], sizes = [16, 8], strides = [1, 1]} : vector<16x32xf32> to vector<16x8xf32>
    %cst_15 = arith.constant dense<0.000000e+00> : vector<16x16xf32>
    %34 = tpu.matmul %31, %32, %cst_15 {dimension_numbers = #tpu.dot_dimension_numbers<[1], [1], [0], [0], [0, 0, 1, 0], [], []>} : vector<16x8xf32>, vector<16x8xf32>, vector<16x16xf32> -> vector<16x16xf32>
    %35 = arith.addf %34, %1 : vector<16x16xf32>
    %cst_16 = arith.constant dense<0xFF800000> : vector<16xf32>
    %36 = vector.multi_reduction <maximumf>, %35, %cst_16 [1] : vector<16x16xf32> to vector<16xf32>
    %37 = vector.shape_cast %36 : vector<16xf32> to vector<16x1xf32>
    %38 = vector.broadcast %37 : vector<16x1xf32> to vector<16x16xf32>
    %39 = arith.subf %35, %38 : vector<16x16xf32>
    %40 = math.exp %39 : vector<16x16xf32>
    %cst_17 = arith.constant dense<0.000000e+00> : vector<16xf32>
    %41 = vector.multi_reduction <add>, %40, %cst_17 [1] : vector<16x16xf32> to vector<16xf32>
    %42 = vector.shape_cast %41 : vector<16xf32> to vector<16x1xf32>
    %43 = tpu.reciprocal %42 : vector<16x1xf32> -> vector<16x1xf32>
    %44 = vector.broadcast %43 : vector<16x1xf32> to vector<16x16xf32>
    %45 = arith.mulf %40, %44 : vector<16x16xf32>
    %cst_18 = arith.constant dense<0.000000e+00> : vector<16x8xf32>
    %46 = tpu.matmul %45, %33, %cst_18 {dimension_numbers = #tpu.dot_dimension_numbers<[1], [0], [0], [1], [0, 0, 1, 1], [], []>} : vector<16x16xf32>, vector<16x8xf32>, vector<16x8xf32> -> vector<16x8xf32>
    %47 = vector.extract_strided_slice %2 {offsets = [8, 0], sizes = [8, 32], strides = [1, 1]} : vector<32x32xf32> to vector<8x32xf32>
    %cst_19 = arith.constant dense<0.000000e+00> : vector<16x32xf32>
    %48 = tpu.matmul %46, %47, %cst_19 {dimension_numbers = #tpu.dot_dimension_numbers<[1], [0], [0], [1], [0, 0, 1, 1], [], []>} : vector<16x8xf32>, vector<8x32xf32>, vector<16x32xf32> -> vector<16x32xf32>
    %49 = arith.addf %30, %48 : vector<16x32xf32>
    %50 = vector.extract_strided_slice %10 {offsets = [0, 16], sizes = [16, 8], strides = [1, 1]} : vector<16x32xf32> to vector<16x8xf32>
    %51 = vector.extract_strided_slice %11 {offsets = [0, 16], sizes = [16, 8], strides = [1, 1]} : vector<16x32xf32> to vector<16x8xf32>
    %52 = vector.extract_strided_slice %12 {offsets = [0, 16], sizes = [16, 8], strides = [1, 1]} : vector<16x32xf32> to vector<16x8xf32>
    %cst_20 = arith.constant dense<0.000000e+00> : vector<16x16xf32>
    %53 = tpu.matmul %50, %51, %cst_20 {dimension_numbers = #tpu.dot_dimension_numbers<[1], [1], [0], [0], [0, 0, 1, 0], [], []>} : vector<16x8xf32>, vector<16x8xf32>, vector<16x16xf32> -> vector<16x16xf32>
    %54 = arith.addf %53, %1 : vector<16x16xf32>
    %cst_21 = arith.constant dense<0xFF800000> : vector<16xf32>
    %55 = vector.multi_reduction <maximumf>, %54, %cst_21 [1] : vector<16x16xf32> to vector<16xf32>
    %56 = vector.shape_cast %55 : vector<16xf32> to vector<16x1xf32>
    %57 = vector.broadcast %56 : vector<16x1xf32> to vector<16x16xf32>
    %58 = arith.subf %54, %57 : vector<16x16xf32>
    %59 = math.exp %58 : vector<16x16xf32>
    %cst_22 = arith.constant dense<0.000000e+00> : vector<16xf32>
    %60 = vector.multi_reduction <add>, %59, %cst_22 [1] : vector<16x16xf32> to vector<16xf32>
    %61 = vector.shape_cast %60 : vector<16xf32> to vector<16x1xf32>
    %62 = tpu.reciprocal %61 : vector<16x1xf32> -> vector<16x1xf32>
    %63 = vector.broadcast %62 : vector<16x1xf32> to vector<16x16xf32>
    %64 = arith.mulf %59, %63 : vector<16x16xf32>
    %cst_23 = arith.constant dense<0.000000e+00> : vector<16x8xf32>
    %65 = tpu.matmul %64, %52, %cst_23 {dimension_numbers = #tpu.dot_dimension_numbers<[1], [0], [0], [1], [0, 0, 1, 1], [], []>} : vector<16x16xf32>, vector<16x8xf32>, vector<16x8xf32> -> vector<16x8xf32>
    %66 = vector.extract_strided_slice %2 {offsets = [16, 0], sizes = [8, 32], strides = [1, 1]} : vector<32x32xf32> to vector<8x32xf32>
    %cst_24 = arith.constant dense<0.000000e+00> : vector<16x32xf32>
    %67 = tpu.matmul %65, %66, %cst_24 {dimension_numbers = #tpu.dot_dimension_numbers<[1], [0], [0], [1], [0, 0, 1, 1], [], []>} : vector<16x8xf32>, vector<8x32xf32>, vector<16x32xf32> -> vector<16x32xf32>
    %68 = arith.addf %49, %67 : vector<16x32xf32>
    %69 = vector.extract_strided_slice %10 {offsets = [0, 24], sizes = [16, 8], strides = [1, 1]} : vector<16x32xf32> to vector<16x8xf32>
    %70 = vector.extract_strided_slice %11 {offsets = [0, 24], sizes = [16, 8], strides = [1, 1]} : vector<16x32xf32> to vector<16x8xf32>
    %71 = vector.extract_strided_slice %12 {offsets = [0, 24], sizes = [16, 8], strides = [1, 1]} : vector<16x32xf32> to vector<16x8xf32>
    %cst_25 = arith.constant dense<0.000000e+00> : vector<16x16xf32>
    %72 = tpu.matmul %69, %70, %cst_25 {dimension_numbers = #tpu.dot_dimension_numbers<[1], [1], [0], [0], [0, 0, 1, 0], [], []>} : vector<16x8xf32>, vector<16x8xf32>, vector<16x16xf32> -> vector<16x16xf32>
    %73 = arith.addf %72, %1 : vector<16x16xf32>
    %cst_26 = arith.constant dense<0xFF800000> : vector<16xf32>
    %74 = vector.multi_reduction <maximumf>, %73, %cst_26 [1] : vector<16x16xf32> to vector<16xf32>
    %75 = vector.shape_cast %74 : vector<16xf32> to vector<16x1xf32>
    %76 = vector.broadcast %75 : vector<16x1xf32> to vector<16x16xf32>
    %77 = arith.subf %73, %76 : vector<16x16xf32>
    %78 = math.exp %77 : vector<16x16xf32>
    %cst_27 = arith.constant dense<0.000000e+00> : vector<16xf32>
    %79 = vector.multi_reduction <add>, %78, %cst_27 [1] : vector<16x16xf32> to vector<16xf32>
    %80 = vector.shape_cast %79 : vector<16xf32> to vector<16x1xf32>
    %81 = tpu.reciprocal %80 : vector<16x1xf32> -> vector<16x1xf32>
    %82 = vector.broadcast %81 : vector<16x1xf32> to vector<16x16xf32>
    %83 = arith.mulf %78, %82 : vector<16x16xf32>
    %cst_28 = arith.constant dense<0.000000e+00> : vector<16x8xf32>
    %84 = tpu.matmul %83, %71, %cst_28 {dimension_numbers = #tpu.dot_dimension_numbers<[1], [0], [0], [1], [0, 0, 1, 1], [], []>} : vector<16x16xf32>, vector<16x8xf32>, vector<16x8xf32> -> vector<16x8xf32>
    %85 = vector.extract_strided_slice %2 {offsets = [24, 0], sizes = [8, 32], strides = [1, 1]} : vector<32x32xf32> to vector<8x32xf32>
    %cst_29 = arith.constant dense<0.000000e+00> : vector<16x32xf32>
    %86 = tpu.matmul %84, %85, %cst_29 {dimension_numbers = #tpu.dot_dimension_numbers<[1], [0], [0], [1], [0, 0, 1, 1], [], []>} : vector<16x8xf32>, vector<8x32xf32>, vector<16x32xf32> -> vector<16x32xf32>
    %87 = arith.addf %68, %86 : vector<16x32xf32>
    %88 = arith.addf %0, %87 : vector<16x32xf32>
    %c0_30 = arith.constant 0 : index
    %c0_31 = arith.constant 0 : index
    %89 = vector.load %arg6[%c0_30, %c0_31] : memref<1x32xf32, #tpu.memory_space<vmem>>, vector<1x32xf32>
    %90 = vector.broadcast %89 : vector<1x32xf32> to vector<16x32xf32>
    %91 = arith.addf %88, %90 : vector<16x32xf32>
    %cst_32 = arith.constant dense<0.000000e+00> : vector<16xf32>
    %92 = vector.multi_reduction <add>, %91, %cst_32 [1] : vector<16x32xf32> to vector<16xf32>
    %93 = vector.shape_cast %92 : vector<16xf32> to vector<16x1xf32>
    %cst_33 = arith.constant 3.200000e+01 : f32
    %94 = vector.broadcast %cst_33 : f32 to vector<16x1xf32>
    %95 = arith.divf %93, %94 : vector<16x1xf32>
    %96 = vector.broadcast %95 : vector<16x1xf32> to vector<16x32xf32>
    %97 = arith.subf %91, %96 : vector<16x32xf32>
    %98 = arith.mulf %97, %97 : vector<16x32xf32>
    %cst_34 = arith.constant dense<0.000000e+00> : vector<16xf32>
    %99 = vector.multi_reduction <add>, %98, %cst_34 [1] : vector<16x32xf32> to vector<16xf32>
    %100 = vector.shape_cast %99 : vector<16xf32> to vector<16x1xf32>
    %cst_35 = arith.constant 3.200000e+01 : f32
    %101 = vector.broadcast %cst_35 : f32 to vector<16x1xf32>
    %102 = arith.divf %100, %101 : vector<16x1xf32>
    %103 = vector.broadcast %95 : vector<16x1xf32> to vector<16x32xf32>
    %104 = arith.subf %91, %103 : vector<16x32xf32>
    %cst_36 = arith.constant 9.99999974E-6 : f32
    %105 = vector.broadcast %cst_36 : f32 to vector<16x1xf32>
    %106 = arith.addf %102, %105 : vector<16x1xf32>
    %107 = math.rsqrt %106 : vector<16x1xf32>
    %108 = vector.broadcast %107 : vector<16x1xf32> to vector<16x32xf32>
    %109 = arith.mulf %104, %108 : vector<16x32xf32>
    %c0_37 = arith.constant 0 : index
    %c0_38 = arith.constant 0 : index
    %110 = vector.load %arg7[%c0_37, %c0_38] : memref<1x32xf32, #tpu.memory_space<vmem>>, vector<1x32xf32>
    %111 = vector.broadcast %110 : vector<1x32xf32> to vector<16x32xf32>
    %112 = arith.mulf %109, %111 : vector<16x32xf32>
    %c0_39 = arith.constant 0 : index
    %c0_40 = arith.constant 0 : index
    %113 = vector.load %arg8[%c0_39, %c0_40] : memref<1x32xf32, #tpu.memory_space<vmem>>, vector<1x32xf32>
    %114 = vector.broadcast %113 : vector<1x32xf32> to vector<16x32xf32>
    %115 = arith.addf %112, %114 : vector<16x32xf32>
    %c0_41 = arith.constant 0 : index
    %c0_42 = arith.constant 0 : index
    %116 = vector.load %arg9[%c0_41, %c0_42] : memref<16x32xf32, #tpu.memory_space<vmem>>, vector<16x32xf32>
    tpu.vector_store %arg9[%c0_41, %c0_42], %115 {strides = array<i32>} : memref<16x32xf32, #tpu.memory_space<vmem>>, vector<16x32xf32>,
    return
  }
  func.func @transform_0(%arg0: i32) -> (i32, i32) {
    %c0_i32 = arith.constant 0 : i32
    %c0_i32_0 = arith.constant 0 : i32
    %c0_i32_1 = arith.constant 0 : i32
    return %c0_i32, %c0_i32_0 : i32, i32
  }
  func.func @transform_1(%arg0: i32) -> (i32, i32) {
    %c0_i32 = arith.constant 0 : i32
    %c0_i32_0 = arith.constant 0 : i32
    %c0_i32_1 = arith.constant 0 : i32
    return %c0_i32, %c0_i32_0 : i32, i32
  }
  func.func @transform_2(%arg0: i32) -> (i32, i32) {
    %c0_i32 = arith.constant 0 : i32
    %c0_i32_0 = arith.constant 0 : i32
    %c0_i32_1 = arith.constant 0 : i32
    return %c0_i32, %c0_i32_0 : i32, i32
  }
  func.func @transform_3(%arg0: i32) -> (i32, i32) {
    %c0_i32 = arith.constant 0 : i32
    %c0_i32_0 = arith.constant 0 : i32
    %c0_i32_1 = arith.constant 0 : i32
    return %c0_i32, %c0_i32_0 : i32, i32
  }
  func.func @transform_4(%arg0: i32) -> (i32, i32) {
    %c0_i32 = arith.constant 0 : i32
    %c0_i32_0 = arith.constant 0 : i32
    %c0_i32_1 = arith.constant 0 : i32
    return %c0_i32, %c0_i32_0 : i32, i32
  }
  func.func @transform_5(%arg0: i32) -> (i32, i32) {
    %c0_i32 = arith.constant 0 : i32
    %c0_i32_0 = arith.constant 0 : i32
    %c0_i32_1 = arith.constant 0 : i32
    return %c0_i32, %c0_i32_0 : i32, i32
  }
  func.func @transform_6(%arg0: i32) -> (i32, i32) {
    %c0_i32 = arith.constant 0 : i32
    %c0_i32_0 = arith.constant 0 : i32
    %c0_i32_1 = arith.constant 0 : i32
    return %c0_i32, %c0_i32_0 : i32, i32
  }
  func.func @transform_7(%arg0: i32) -> (i32, i32) {
    %c0_i32 = arith.constant 0 : i32
    %c0_i32_0 = arith.constant 0 : i32
    %c0_i32_1 = arith.constant 0 : i32
    return %c0_i32, %c0_i32_0 : i32, i32
  }
  func.func @transform_8(%arg0: i32) -> (i32, i32) {
    %c0_i32 = arith.constant 0 : i32
    %c0_i32_0 = arith.constant 0 : i32
    %c0_i32_1 = arith.constant 0 : i32
    return %c0_i32, %c0_i32_0 : i32, i32
  }
}

</mosaic_0001>

<llo_original>
// kernel: tpu_custom_call.1
$region0: #{tpu_custom_call.1}
  #allocation0 [shape = 'u32[]', space=smem, size = 0x4, offset = 0x4, fixed_abs, tag = 'smem constant byte address 0x4 - core index']
  #allocation1 [shape = 'u32[144,128]{1,0:T(1,128)}', space=vmem, size = 0x12000, scoped, tag = 'internal scratch']
  %s0 = inlined_call_operand.vmem [shape: f32[16,32], index: 0, kind: input, shape index: {}]
  %s1 = inlined_call_operand.vmem [shape: f32[16,16], index: 1, kind: input, shape index: {}]
  %s2 = inlined_call_operand.vmem [shape: f32[96,32], index: 2, kind: input, shape index: {}]
  %s3 = inlined_call_operand.vmem [shape: f32[1,96], index: 3, kind: input, shape index: {}]
  %s4 = inlined_call_operand.vmem [shape: f32[32,32], index: 4, kind: input, shape index: {}]
  %s5 = inlined_call_operand.vmem [shape: f32[1,32], index: 5, kind: input, shape index: {}]
  %s6 = inlined_call_operand.vmem [shape: f32[1,32], index: 6, kind: input, shape index: {}]
  %s7 = inlined_call_operand.vmem [shape: f32[1,32], index: 7, kind: input, shape index: {}]
  %s8 = inlined_call_operand.hbm [shape: f32[16,32], index: 8, kind: output, shape index: {}]
  %s9 = sld [smem:[#allocation0]]
  $region42: #{tpu_custom_call.1} parent=0
    _
  %s11 = ssub.s32 1, %s9
  %s12 = scalar_select 0, %s11, %s9
  $region1: #{tpu_custom_call.1} parent=0
    #allocation2 [shape = 'u8[8192]{0}', space=vmem, size = 0x2000, scoped, tag = 'output window, operand 0, single buffered']
    #allocation3 [shape = 's32[1]{0}', space=sflag, size = 0x4, scoped, tag = 'scoped memory for tpu_custom_call.1']
    %13 = vsyncpa [#allocation3], 0
    // Predicated region
    $region2: #{tpu_custom_call.1} parent=1 // pred_check
      _
    $region3: #{tpu_custom_call.1} parent=1 // pred_check_branch
      %15 = sbr.rel (0) target = $region5
    $region4: #{tpu_custom_call.1} parent=1 // pred_region
      _
    $region5: #{tpu_custom_call.1} parent=1 // pred_fallthru
      _
    // Predicated region
    $region6: #{tpu_custom_call.1} parent=1 // pred_check
      _
    $region7: #{tpu_custom_call.1} parent=1 // pred_check_branch
      %17 = sbr.rel (0) target = $region9
    $region8: #{tpu_custom_call.1} parent=1 // pred_region
      _
    $region9: #{tpu_custom_call.1} parent=1 // pred_fallthru
      _
    // Predicated region
    $region10: #{tpu_custom_call.1} parent=1 // pred_check
      _
    $region11: #{tpu_custom_call.1} parent=1 // pred_check_branch
      %19 = sbr.rel (0) target = $region13
    $region12: #{tpu_custom_call.1} parent=1 // pred_region
      _
    $region13: #{tpu_custom_call.1} parent=1 // pred_fallthru
      _
    // Predicated region
    $region14: #{tpu_custom_call.1} parent=1 // pred_check
      _
    $region15: #{tpu_custom_call.1} parent=1 // pred_check_branch
      %21 = sbr.rel (0) target = $region17
    $region16: #{tpu_custom_call.1} parent=1 // pred_region
      _
    $region17: #{tpu_custom_call.1} parent=1 // pred_fallthru
      _
    // Predicated region
    $region18: #{tpu_custom_call.1} parent=1 // pred_check
      _
    $region19: #{tpu_custom_call.1} parent=1 // pred_check_branch
      %23 = sbr.rel (0) target = $region21
    $region20: #{tpu_custom_call.1} parent=1 // pred_region
      _
    $region21: #{tpu_custom_call.1} parent=1 // pred_fallthru
      _
    // Predicated region
    $region22: #{tpu_custom_call.1} parent=1 // pred_check
      _
    $region23: #{tpu_custom_call.1} parent=1 // pred_check_branch
      %25 = sbr.rel (0) target = $region25
    $region24: #{tpu_custom_call.1} parent=1 // pred_region
      _
    $region25: #{tpu_custom_call.1} parent=1 // pred_fallthru
      _
    // Predicated region
    $region26: #{tpu_custom_call.1} parent=1 // pred_check
      _
    $region27: #{tpu_custom_call.1} parent=1 // pred_check_branch
      %27 = sbr.rel (0) target = $region29
    $region28: #{tpu_custom_call.1} parent=1 // pred_region
      _
    $region29: #{tpu_custom_call.1} parent=1 // pred_fallthru
      _
    // Predicated region
    $region30: #{tpu_custom_call.1} parent=1 // pred_check
      _
    $region31: #{tpu_custom_call.1} parent=1 // pred_check_branch
      %29 = sbr.rel (0) target = $region33
    $region32: #{tpu_custom_call.1} parent=1 // pred_region
      _
    $region33: #{tpu_custom_call.1} parent=1 // pred_fallthru
      _
    %v30 = vld [vmem:[%s0] sm:$0xff]
    %v31 = vld [vmem:[%s0 + $0x8] sm:$0xff]
    %v32 = vld [vmem:[%s1] sm:$0xff]
    %v33 = vld [vmem:[%s1 + $0x8] sm:$0xff]
    %v34 = vld [vmem:[%s4] sm:$0xff]
    %v35 = vld [vmem:[%s4 + $0x8] sm:$0xff]
    %v36 = vld [vmem:[%s4 + $0x10] sm:$0xff]
    %v37 = vld [vmem:[%s4 + $0x18] sm:$0xff]
    %v38 = vld [vmem:[%s2] sm:$0xff]
    %v39 = vld [vmem:[%s2 + $0x8] sm:$0xff]
    %v40 = vld [vmem:[%s2 + $0x10] sm:$0xff]
    %v41 = vld [vmem:[%s2 + $0x18] sm:$0xff]
    %v42 = vld [vmem:[%s2 + $0x20] sm:$0xff]
    %v43 = vld [vmem:[%s2 + $0x28] sm:$0xff]
    %v44 = vld [vmem:[%s2 + $0x30] sm:$0xff]
    %v45 = vld [vmem:[%s2 + $0x38] sm:$0xff]
    %v46 = vld [vmem:[%s2 + $0x40] sm:$0xff]
    %v47 = vld [vmem:[%s2 + $0x48] sm:$0xff]
    %v48 = vld [vmem:[%s2 + $0x50] sm:$0xff]
    %v49 = vld [vmem:[%s2 + $0x58] sm:$0xff]
    %v50 = vld [vmem:[%s3] sm:$0x1]
    %v52 = vlaneseq
    %v53 = vshrl.u32 %v52, 7
    %v54 = vsub.s32 0, %v53
    %v55 = vrot.slane %v50, %v54
    %vm57 = vcmask 261120
    %v59 = vsel %vm57, %v30, 0
    %v62 = vsel %vm57, %v31, 0
    %v65 = vsel %vm57, %v38, 0
    %v68 = vsel %vm57, %v39, 0
    %v71 = vsel %vm57, %v40, 0
    %v74 = vsel %vm57, %v41, 0
    %v77 = vsel %vm57, %v42, 0
    %v80 = vsel %vm57, %v43, 0
    %v83 = vsel %vm57, %v44, 0
    %v86 = vsel %vm57, %v45, 0
    %v89 = vsel %vm57, %v46, 0
    %v92 = vsel %vm57, %v47, 0
    %v95 = vsel %vm57, %v48, 0
    %v98 = vsel %vm57, %v49, 0
    %100 = vmatprep.subr.mxu0 0.0
    %101 = vmatpush1.xpose.msra.mxu0 %v65
    %102 = vmatprep.subr.mxu0 0.0
    %103 = vmatpush1.xpose.msra.mxu0 %v68
    %104 = vmatprep.subr.mxu0 0.0
    %105 = vmatpush1.xpose.msra.mxu0 %v71
    %106 = vmatprep.subr.mxu0 0.0
    %107 = vmatpush1.xpose.msra.mxu0 %v74
    %108 = vmatprep.subr.mxu0 0.0
    %109 = vmatpush1.xpose.msra.mxu0 %v77
    %110 = vmatprep.subr.mxu0 0.0
    %111 = vmatpush1.xpose.msra.mxu0 %v80
    %112 = vmatprep.subr.mxu0 0.0
    %113 = vmatpush1.xpose.msra.mxu0 %v83
    %114 = vmatprep.subr.mxu0 0.0
    %115 = vmatpush1.xpose.msra.mxu0 %v86
    %116 = vmatprep.subr.mxu0 0.0
    %117 = vmatpush1.xpose.msra.mxu0 %v89
    %118 = vmatprep.subr.mxu0 0.0
    %119 = vmatpush1.xpose.msra.mxu0 %v92
    %120 = vmatprep.subr.mxu0 0.0
    %121 = vmatpush1.xpose.msra.mxu0 %v95
    %122 = vmatprep.subr.mxu0 0.0
    %123 = vmatpush1.xpose.msra.mxu0 %v98
    %124 = vmatprep.subr.mxu0 0.0
    %125 = vmatpush1.xpose.msra.mxu0 0.0
    %126 = vmatprep.subr.mxu0 0.0
    %127 = vmatpush1.xpose.msra.mxu0 0.0
    %128 = vmatprep.subr.mxu0 0.0
    %129 = vmatpush1.xpose.msra.mxu0 0.0
    %130 = vmatprep.subr.mxu0 0.0
    %131 = vmatpush1.xpose.msra.mxu0 0.0
    %132 = vmatprep.subr.mxu0 0.0
    %133 = vmatpush1.xpose.msra.mxu0 0.0
    %134 = vmatprep.subr.mxu0 0.0
    %135 = vmatpush1.xpose.msra.mxu0 0.0
    %136 = vmatprep.subr.mxu0 0.0
    %137 = vmatpush1.xpose.msra.mxu0 0.0
    %138 = vmatprep.subr.mxu0 0.0
    %139 = vmatpush1.xpose.msra.mxu0 0.0
    %140 = vmatprep.subr.mxu0 0.0
    %141 = vmatpush1.xpose.msra.mxu0 0.0
    %142 = vmatprep.subr.mxu0 0.0
    %143 = vmatpush1.xpose.msra.mxu0 0.0
    %144 = vmatprep.subr.mxu0 0.0
    %145 = vmatpush1.xpose.msra.mxu0 0.0
    %146 = vmatprep.subr.mxu0 0.0
    %147 = vmatpush1.xpose.msra.mxu0 0.0
    %148 = vmatprep.subr.mxu0 0.0
    %149 = vmatpush1.xpose.msra.mxu0 0.0
    %150 = vmatprep.subr.mxu0 0.0
    %151 = vmatpush1.xpose.msra.mxu0 0.0
    %152 = vmatprep.subr.mxu0 0.0
    %153 = vmatpush1.xpose.msra.mxu0 0.0
    %154 = vmatprep.subr.mxu0 0.0
    %155 = vmatpush1.xpose.msra.mxu0 0.0
    %156 = vmatprep.subr.mxu0 0.0
    %157 = vmatpush1.xpose.msra.mxu0 0.0
    %158 = vmatprep.subr.mxu0 0.0
    %159 = vmatpush1.xpose.msra.mxu0 0.0
    %160 = vmatprep.subr.mxu0 0.0
    %161 = vmatpush1.xpose.msra.mxu0 0.0
    %162 = vmatprep.subr.mxu0 0.0
    %163 = vmatpush1.xpose.msra.mxu0 0.0
    %164 = vmatprep.mubr.f32.mxu0 0.0
    %165 = vmatmul.mubr.f32.gmra.mrb[0].mxu0 %v59
    %v166 = vpop.f32.mrb[0].mxu0
    %v167 = vadd.f32 %v55, %v166
    %v168 = vpop.f32.mrb[0].mxu0
    %169 = vmatprep.mubr.f32.mxu0 0.0
    %170 = vmatmul.mubr.f32.gmra.mrb[0].mxu0 %v62
    %v171 = vpop.f32.mrb[0].mxu0
    %v172 = vadd.f32 %v55, %v171
    %v173 = vpop.f32.mrb[0].mxu0
    %174 = vdwg.mxu0
    %v175 = vmul.f32 %v167, 0.35355338
    %v176 = vmul.f32 %v172, 0.35355338
    %179 = vrot.lane.b32.xlu0 %v167, 96
    %v180 = vpop.permute.xlu0 %179
    %181 = vrot.lane.b32.xlu0 %v172, 96
    %v182 = vpop.permute.xlu0 %181
    %vm183 = vcmask 64512
    %v185 = vsel %vm183, %v175, 0
    %v188 = vsel %vm183, %v176, 0
    %v190 = vsel %vm183, %v180, 0
    %v192 = vsel %vm183, %v182, 0
    %194 = vmatprep.subr.mxu0 0.0
    %195 = vmatpush1.xpose.msra.mxu0 %v190
    %196 = vmatprep.subr.mxu0 0.0
    %197 = vmatpush1.xpose.msra.mxu0 %v192
    %198 = vmatprep.subr.mxu0 0.0
    %199 = vmatpush1.xpose.msra.mxu0 0.0
    %200 = vmatprep.subr.mxu0 0.0
    %201 = vmatpush1.xpose.msra.mxu0 0.0
    %202 = vmatprep.subr.mxu0 0.0
    %203 = vmatpush1.xpose.msra.mxu0 0.0
    %204 = vmatprep.subr.mxu0 0.0
    %205 = vmatpush1.xpose.msra.mxu0 0.0
    %206 = vmatprep.subr.mxu0 0.0
    %207 = vmatpush1.xpose.msra.mxu0 0.0
    %208 = vmatprep.subr.mxu0 0.0
    %209 = vmatpush1.xpose.msra.mxu0 0.0
    %210 = vmatprep.subr.mxu0 0.0
    %211 = vmatpush1.xpose.msra.mxu0 0.0
    %212 = vmatprep.subr.mxu0 0.0
    %213 = vmatpush1.xpose.msra.mxu0 0.0
    %214 = vmatprep.subr.mxu0 0.0
    %215 = vmatpush1.xpose.msra.mxu0 0.0
    %216 = vmatprep.subr.mxu0 0.0
    %217 = vmatpush1.xpose.msra.mxu0 0.0
    %218 = vmatprep.subr.mxu0 0.0
    %219 = vmatpush1.xpose.msra.mxu0 0.0
    %220 = vmatprep.subr.mxu0 0.0
    %221 = vmatpush1.xpose.msra.mxu0 0.0
    %222 = vmatprep.subr.mxu0 0.0
    %223 = vmatpush1.xpose.msra.mxu0 0.0
    %224 = vmatprep.subr.mxu0 0.0
    %225 = vmatpush1.xpose.msra.mxu0 0.0
    %226 = vmatprep.subr.mxu0 0.0
    %227 = vmatpush1.xpose.msra.mxu0 0.0
    %228 = vmatprep.subr.mxu0 0.0
    %229 = vmatpush1.xpose.msra.mxu0 0.0
    %230 = vmatprep.subr.mxu0 0.0
    %231 = vmatpush1.xpose.msra.mxu0 0.0
    %232 = vmatprep.subr.mxu0 0.0
    %233 = vmatpush1.xpose.msra.mxu0 0.0
    %234 = vmatprep.subr.mxu0 0.0
    %235 = vmatpush1.xpose.msra.mxu0 0.0
    %236 = vmatprep.subr.mxu0 0.0
    %237 = vmatpush1.xpose.msra.mxu0 0.0
    %238 = vmatprep.subr.mxu0 0.0
    %239 = vmatpush1.xpose.msra.mxu0 0.0
    %240 = vmatprep.subr.mxu0 0.0
    %241 = vmatpush1.xpose.msra.mxu0 0.0
    %242 = vmatprep.subr.mxu0 0.0
    %243 = vmatpush1.xpose.msra.mxu0 0.0
    %244 = vmatprep.subr.mxu0 0.0
    %245 = vmatpush1.xpose.msra.mxu0 0.0
    %246 = vmatprep.subr.mxu0 0.0
    %247 = vmatpush1.xpose.msra.mxu0 0.0
    %248 = vmatprep.subr.mxu0 0.0
    %249 = vmatpush1.xpose.msra.mxu0 0.0
    %250 = vmatprep.subr.mxu0 0.0
    %251 = vmatpush1.xpose.msra.mxu0 0.0
    %252 = vmatprep.subr.mxu0 0.0
    %253 = vmatpush1.xpose.msra.mxu0 0.0
    %254 = vmatprep.subr.mxu0 0.0
    %255 = vmatpush1.xpose.msra.mxu0 0.0
    %256 = vmatprep.subr.mxu0 0.0
    %257 = vmatpush1.xpose.msra.mxu0 0.0
    %258 = vmatprep.mubr.f32.mxu0 0.0
    %259 = vmatmul.mubr.f32.gmra.mrb[0].mxu0 %v185
    %v260 = vpop.f32.mrb[0].mxu0
    %v261 = vadd.f32 %v32, %v260
    %v262 = vpop.f32.mrb[0].mxu0
    %263 = vmatprep.mubr.f32.mxu0 0.0
    %264 = vmatmul.mubr.f32.gmra.mrb[0].mxu0 %v188
    %v265 = vpop.f32.mrb[0].mxu0
    %v266 = vadd.f32 %v33, %v265
    %v267 = vpop.f32.mrb[0].mxu0
    %268 = vdwg.mxu0
    %vm269 = vcmask 130048
    %v270 = vsel %vm269, %v261, -inf
    %271 = vmax.xlane.f32.xlu0 %v270
    %v272 = vpop.xlane.xlu0 %271
    %v273 = vsel %vm269, %v266, -inf
    %274 = vmax.xlane.f32.xlu0 %v273
    %v275 = vpop.xlane.xlu0 %274
    %v276 = vsub.f32 %v261, %v272
    %v277 = vsub.f32 %v266, %v275
    %v278 = vmul.f32 %v276, 1.442695
    %v279 = vpow.pop %v278
    %v280 = vmul.f32 %v277, 1.442695
    %v281 = vpow.pop %v280
    %v282 = vsel %vm269, %v279, 0.0
    %283 = vadd.xlane.f32.xlu0 %v282
    %v284 = vpop.xlane.xlu0 %283
    %v285 = vsel %vm269, %v281, 0.0
    %286 = vadd.xlane.f32.xlu0 %v285
    %v287 = vpop.xlane.xlu0 %286
    %v288 = vrcp.pop %v284
    %v289 = vrcp.pop %v287
    %v290 = vmul.f32 %v279, %v288
    %v291 = vmul.f32 %v281, %v289
    %292 = vrot.lane.b32.xlu0 %v167, 64
    %v293 = vpop.permute.xlu0 %292
    %294 = vrot.lane.b32.xlu0 %v172, 64
    %v295 = vpop.permute.xlu0 %294
    %v299 = vsel %vm269, %v290, 0
    %v302 = vsel %vm269, %v291, 0
    %304 = vmatprep.subr.mxu0 0.0
    %305 = vmatpush1.msra.mxu0 %v293
    %306 = vmatprep.subr.mxu0 0.0
    %307 = vmatpush1.msra.mxu0 %v295
    %308 = vmatprep.subr.mxu0 0.0
    %309 = vmatpush1.msra.mxu0 0.0
    %310 = vmatprep.subr.mxu0 0.0
    %311 = vmatpush1.msra.mxu0 0.0
    %312 = vmatprep.subr.mxu0 0.0
    %313 = vmatpush1.msra.mxu0 0.0
    %314 = vmatprep.subr.mxu0 0.0
    %315 = vmatpush1.msra.mxu0 0.0
    %316 = vmatprep.subr.mxu0 0.0
    %317 = vmatpush1.msra.mxu0 0.0
    %318 = vmatprep.subr.mxu0 0.0
    %319 = vmatpush1.msra.mxu0 0.0
    %320 = vmatprep.subr.mxu0 0.0
    %321 = vmatpush1.msra.mxu0 0.0
    %322 = vmatprep.subr.mxu0 0.0
    %323 = vmatpush1.msra.mxu0 0.0
    %324 = vmatprep.subr.mxu0 0.0
    %325 = vmatpush1.msra.mxu0 0.0
    %326 = vmatprep.subr.mxu0 0.0
    %327 = vmatpush1.msra.mxu0 0.0
    %328 = vmatprep.subr.mxu0 0.0
    %329 = vmatpush1.msra.mxu0 0.0
    %330 = vmatprep.subr.mxu0 0.0
    %331 = vmatpush1.msra.mxu0 0.0
    %332 = vmatprep.subr.mxu0 0.0
    %333 = vmatpush1.msra.mxu0 0.0
    %334 = vmatprep.subr.mxu0 0.0
    %335 = vmatpush1.msra.mxu0 0.0
    %336 = vmatprep.subr.mxu0 0.0
    %337 = vmatpush1.msra.mxu0 0.0
    %338 = vmatprep.subr.mxu0 0.0
    %339 = vmatpush1.msra.mxu0 0.0
    %340 = vmatprep.subr.mxu0 0.0
    %341 = vmatpush1.msra.mxu0 0.0
    %342 = vmatprep.subr.mxu0 0.0
    %343 = vmatpush1.msra.mxu0 0.0
    %344 = vmatprep.subr.mxu0 0.0
    %345 = vmatpush1.msra.mxu0 0.0
    %346 = vmatprep.subr.mxu0 0.0
    %347 = vmatpush1.msra.mxu0 0.0
    %348 = vmatprep.subr.mxu0 0.0
    %349 = vmatpush1.msra.mxu0 0.0
    %350 = vmatprep.subr.mxu0 0.0
    %351 = vmatpush1.msra.mxu0 0.0
    %352 = vmatprep.subr.mxu0 0.0
    %353 = vmatpush1.msra.mxu0 0.0
    %354 = vmatprep.subr.mxu0 0.0
    %355 = vmatpush1.msra.mxu0 0.0
    %356 = vmatprep.subr.mxu0 0.0
    %357 = vmatpush1.msra.mxu0 0.0
    %358 = vmatprep.subr.mxu0 0.0
    %359 = vmatpush1.msra.mxu0 0.0
    %360 = vmatprep.subr.mxu0 0.0
    %361 = vmatpush1.msra.mxu0 0.0
    %362 = vmatprep.subr.mxu0 0.0
    %363 = vmatpush1.msra.mxu0 0.0
    %364 = vmatprep.subr.mxu0 0.0
    %365 = vmatpush1.msra.mxu0 0.0
    %366 = vmatprep.subr.mxu0 0.0
    %367 = vmatpush1.msra.mxu0 0.0
    %368 = vmatprep.mubr.f32.mxu0 0.0
    %369 = vmatmul.mubr.f32.gmra.mrb[0].mxu0 %v299
    %v370 = vpop.f32.mrb[0].mxu0
    %v371 = vadd.f32 0.0, %v370
    %v372 = vpop.f32.mrb[0].mxu0
    %373 = vmatprep.mubr.f32.mxu0 0.0
    %374 = vmatmul.mubr.f32.gmra.mrb[0].mxu0 %v302
    %v375 = vpop.f32.mrb[0].mxu0
    %v376 = vadd.f32 0.0, %v375
    %v377 = vpop.f32.mrb[0].mxu0
    %378 = vdwg.mxu0
    %379 = vrot.lane.b32.xlu0 %v175, 120
    %v380 = vpop.permute.xlu0 %379
    %381 = vrot.lane.b32.xlu0 %v176, 120
    %v382 = vpop.permute.xlu0 %381
    %383 = vrot.lane.b32.xlu0 %v167, 88
    %v384 = vpop.permute.xlu0 %383
    %385 = vrot.lane.b32.xlu0 %v172, 88
    %v386 = vpop.permute.xlu0 %385
    %v387 = vsel %vm183, %v380, 0
    %v389 = vsel %vm183, %v382, 0
    %v391 = vsel %vm183, %v384, 0
    %v393 = vsel %vm183, %v386, 0
    %395 = vmatprep.subr.mxu0 0.0
    %396 = vmatpush1.xpose.msra.mxu0 %v391
    %397 = vmatprep.subr.mxu0 0.0
    %398 = vmatpush1.xpose.msra.mxu0 %v393
    %399 = vmatprep.subr.mxu0 0.0
    %400 = vmatpush1.xpose.msra.mxu0 0.0
    %401 = vmatprep.subr.mxu0 0.0
    %402 = vmatpush1.xpose.msra.mxu0 0.0
    %403 = vmatprep.subr.mxu0 0.0
    %404 = vmatpush1.xpose.msra.mxu0 0.0
    %405 = vmatprep.subr.mxu0 0.0
    %406 = vmatpush1.xpose.msra.mxu0 0.0
    %407 = vmatprep.subr.mxu0 0.0
    %408 = vmatpush1.xpose.msra.mxu0 0.0
    %409 = vmatprep.subr.mxu0 0.0
    %410 = vmatpush1.xpose.msra.mxu0 0.0
    %411 = vmatprep.subr.mxu0 0.0
    %412 = vmatpush1.xpose.msra.mxu0 0.0
    %413 = vmatprep.subr.mxu0 0.0
    %414 = vmatpush1.xpose.msra.mxu0 0.0
    %415 = vmatprep.subr.mxu0 0.0
    %416 = vmatpush1.xpose.msra.mxu0 0.0
    %417 = vmatprep.subr.mxu0 0.0
    %418 = vmatpush1.xpose.msra.mxu0 0.0
    %419 = vmatprep.subr.mxu0 0.0
    %420 = vmatpush1.xpose.msra.mxu0 0.0
    %421 = vmatprep.subr.mxu0 0.0
    %422 = vmatpush1.xpose.msra.mxu0 0.0
    %423 = vmatprep.subr.mxu0 0.0
    %424 = vmatpush1.xpose.msra.mxu0 0.0
    %425 = vmatprep.subr.mxu0 0.0
    %426 = vmatpush1.xpose.msra.mxu0 0.0
    %427 = vmatprep.subr.mxu0 0.0
    %428 = vmatpush1.xpose.msra.mxu0 0.0
    %429 = vmatprep.subr.mxu0 0.0
    %430 = vmatpush1.xpose.msra.mxu0 0.0
    %431 = vmatprep.subr.mxu0 0.0
    %432 = vmatpush1.xpose.msra.mxu0 0.0
    %433 = vmatprep.subr.mxu0 0.0
    %434 = vmatpush1.xpose.msra.mxu0 0.0
    %435 = vmatprep.subr.mxu0 0.0
    %436 = vmatpush1.xpose.msra.mxu0 0.0
    %437 = vmatprep.subr.mxu0 0.0
    %438 = vmatpush1.xpose.msra.mxu0 0.0
    %439 = vmatprep.subr.mxu0 0.0
    %440 = vmatpush1.xpose.msra.mxu0 0.0
    %441 = vmatprep.subr.mxu0 0.0
    %442 = vmatpush1.xpose.msra.mxu0 0.0
    %443 = vmatprep.subr.mxu0 0.0
    %444 = vmatpush1.xpose.msra.mxu0 0.0
    %445 = vmatprep.subr.mxu0 0.0
    %446 = vmatpush1.xpose.msra.mxu0 0.0
    %447 = vmatprep.subr.mxu0 0.0
    %448 = vmatpush1.xpose.msra.mxu0 0.0
    %449 = vmatprep.subr.mxu0 0.0
    %450 = vmatpush1.xpose.msra.mxu0 0.0
    %451 = vmatprep.subr.mxu0 0.0
    %452 = vmatpush1.xpose.msra.mxu0 0.0
    %453 = vmatprep.subr.mxu0 0.0
    %454 = vmatpush1.xpose.msra.mxu0 0.0
    %455 = vmatprep.subr.mxu0 0.0
    %456 = vmatpush1.xpose.msra.mxu0 0.0
    %457 = vmatprep.subr.mxu0 0.0
    %458 = vmatpush1.xpose.msra.mxu0 0.0
    %459 = vmatprep.mubr.f32.mxu0 0.0
    %460 = vmatmul.mubr.f32.gmra.mrb[0].mxu0 %v387
    %v461 = vpop.f32.mrb[0].mxu0
    %v462 = vadd.f32 %v32, %v461
    %v463 = vpop.f32.mrb[0].mxu0
    %464 = vmatprep.mubr.f32.mxu0 0.0
    %465 = vmatmul.mubr.f32.gmra.mrb[0].mxu0 %v389
    %v466 = vpop.f32.mrb[0].mxu0
    %v467 = vadd.f32 %v33, %v466
    %v468 = vpop.f32.mrb[0].mxu0
    %469 = vdwg.mxu0
    %v470 = vsel %vm269, %v462, -inf
    %471 = vmax.xlane.f32.xlu0 %v470
    %v472 = vpop.xlane.xlu0 %471
    %v473 = vsel %vm269, %v467, -inf
    %474 = vmax.xlane.f32.xlu0 %v473
    %v475 = vpop.xlane.xlu0 %474
    %v476 = vsub.f32 %v462, %v472
    %v477 = vsub.f32 %v467, %v475
    %v478 = vmul.f32 %v476, 1.442695
    %v479 = vpow.pop %v478
    %v480 = vmul.f32 %v477, 1.442695
    %v481 = vpow.pop %v480
    %v482 = vsel %vm269, %v479, 0.0
    %483 = vadd.xlane.f32.xlu0 %v482
    %v484 = vpop.xlane.xlu0 %483
    %v485 = vsel %vm269, %v481, 0.0
    %486 = vadd.xlane.f32.xlu0 %v485
    %v487 = vpop.xlane.xlu0 %486
    %v488 = vrcp.pop %v484
    %v489 = vrcp.pop %v487
    %v490 = vmul.f32 %v479, %v488
    %v491 = vmul.f32 %v481, %v489
    %492 = vrot.lane.b32.xlu0 %v167, 56
    %v493 = vpop.permute.xlu0 %492
    %494 = vrot.lane.b32.xlu0 %v172, 56
    %v495 = vpop.permute.xlu0 %494
    %v499 = vsel %vm269, %v490, 0
    %v502 = vsel %vm269, %v491, 0
    %504 = vmatprep.subr.mxu0 0.0
    %505 = vmatpush1.msra.mxu0 %v493
    %506 = vmatprep.subr.mxu0 0.0
    %507 = vmatpush1.msra.mxu0 %v495
    %508 = vmatprep.subr.mxu0 0.0
    %509 = vmatpush1.msra.mxu0 0.0
    %510 = vmatprep.subr.mxu0 0.0
    %511 = vmatpush1.msra.mxu0 0.0
    %512 = vmatprep.subr.mxu0 0.0
    %513 = vmatpush1.msra.mxu0 0.0
    %514 = vmatprep.subr.mxu0 0.0
    %515 = vmatpush1.msra.mxu0 0.0
    %516 = vmatprep.subr.mxu0 0.0
    %517 = vmatpush1.msra.mxu0 0.0
    %518 = vmatprep.subr.mxu0 0.0
    %519 = vmatpush1.msra.mxu0 0.0
    %520 = vmatprep.subr.mxu0 0.0
    %521 = vmatpush1.msra.mxu0 0.0
    %522 = vmatprep.subr.mxu0 0.0
    %523 = vmatpush1.msra.mxu0 0.0
    %524 = vmatprep.subr.mxu0 0.0
    %525 = vmatpush1.msra.mxu0 0.0
    %526 = vmatprep.subr.mxu0 0.0
    %527 = vmatpush1.msra.mxu0 0.0
    %528 = vmatprep.subr.mxu0 0.0
    %529 = vmatpush1.msra.mxu0 0.0
    %530 = vmatprep.subr.mxu0 0.0
    %531 = vmatpush1.msra.mxu0 0.0
    %532 = vmatprep.subr.mxu0 0.0
    %533 = vmatpush1.msra.mxu0 0.0
    %534 = vmatprep.subr.mxu0 0.0
    %535 = vmatpush1.msra.mxu0 0.0
    %536 = vmatprep.subr.mxu0 0.0
    %537 = vmatpush1.msra.mxu0 0.0
    %538 = vmatprep.subr.mxu0 0.0
    %539 = vmatpush1.msra.mxu0 0.0
    %540 = vmatprep.subr.mxu0 0.0
    %541 = vmatpush1.msra.mxu0 0.0
    %542 = vmatprep.subr.mxu0 0.0
    %543 = vmatpush1.msra.mxu0 0.0
    %544 = vmatprep.subr.mxu0 0.0
    %545 = vmatpush1.msra.mxu0 0.0
    %546 = vmatprep.subr.mxu0 0.0
    %547 = vmatpush1.msra.mxu0 0.0
    %548 = vmatprep.subr.mxu0 0.0
    %549 = vmatpush1.msra.mxu0 0.0
    %550 = vmatprep.subr.mxu0 0.0
    %551 = vmatpush1.msra.mxu0 0.0
    %552 = vmatprep.subr.mxu0 0.0
    %553 = vmatpush1.msra.mxu0 0.0
    %554 = vmatprep.subr.mxu0 0.0
    %555 = vmatpush1.msra.mxu0 0.0
    %556 = vmatprep.subr.mxu0 0.0
    %557 = vmatpush1.msra.mxu0 0.0
    %558 = vmatprep.subr.mxu0 0.0
    %559 = vmatpush1.msra.mxu0 0.0
    %560 = vmatprep.subr.mxu0 0.0
    %561 = vmatpush1.msra.mxu0 0.0
    %562 = vmatprep.subr.mxu0 0.0
    %563 = vmatpush1.msra.mxu0 0.0
    %564 = vmatprep.subr.mxu0 0.0
    %565 = vmatpush1.msra.mxu0 0.0
    %566 = vmatprep.subr.mxu0 0.0
    %567 = vmatpush1.msra.mxu0 0.0
    %568 = vmatprep.mubr.f32.mxu0 0.0
    %569 = vmatmul.mubr.f32.gmra.mrb[0].mxu0 %v499
    %v570 = vpop.f32.mrb[0].mxu0
    %v571 = vadd.f32 0.0, %v570
    %v572 = vpop.f32.mrb[0].mxu0
    %573 = vmatprep.mubr.f32.mxu0 0.0
    %574 = vmatmul.mubr.f32.gmra.mrb[0].mxu0 %v502
    %v575 = vpop.f32.mrb[0].mxu0
    %v576 = vadd.f32 0.0, %v575
    %v577 = vpop.f32.mrb[0].mxu0
    %578 = vdwg.mxu0
    %v580 = vsel %vm183, %v571, 0
    %v583 = vsel %vm183, %v576, 0
    %585 = vmatprep.subr.mxu0 0.0
    %586 = vmatpush1.msra.mxu0 %v35
    %587 = vmatprep.subr.mxu0 0.0
    %588 = vmatpush1.msra.mxu0 0.0
    %589 = vmatprep.subr.mxu0 0.0
    %590 = vmatpush1.msra.mxu0 0.0
    %591 = vmatprep.subr.mxu0 0.0
    %592 = vmatpush1.msra.mxu0 0.0
    %593 = vmatprep.subr.mxu0 0.0
    %594 = vmatpush1.msra.mxu0 0.0
    %595 = vmatprep.subr.mxu0 0.0
    %596 = vmatpush1.msra.mxu0 0.0
    %597 = vmatprep.subr.mxu0 0.0
    %598 = vmatpush1.msra.mxu0 0.0
    %599 = vmatprep.subr.mxu0 0.0
    %600 = vmatpush1.msra.mxu0 0.0
    %601 = vmatprep.subr.mxu0 0.0
    %602 = vmatpush1.msra.mxu0 0.0
    %603 = vmatprep.subr.mxu0 0.0
    %604 = vmatpush1.msra.mxu0 0.0
    %605 = vmatprep.subr.mxu0 0.0
    %606 = vmatpush1.msra.mxu0 0.0
    %607 = vmatprep.subr.mxu0 0.0
    %608 = vmatpush1.msra.mxu0 0.0
    %609 = vmatprep.subr.mxu0 0.0
    %610 = vmatpush1.msra.mxu0 0.0
    %611 = vmatprep.subr.mxu0 0.0
    %612 = vmatpush1.msra.mxu0 0.0
    %613 = vmatprep.subr.mxu0 0.0
    %614 = vmatpush1.msra.mxu0 0.0
    %615 = vmatprep.subr.mxu0 0.0
    %616 = vmatpush1.msra.mxu0 0.0
    %617 = vmatprep.subr.mxu0 0.0
    %618 = vmatpush1.msra.mxu0 0.0
    %619 = vmatprep.subr.mxu0 0.0
    %620 = vmatpush1.msra.mxu0 0.0
    %621 = vmatprep.subr.mxu0 0.0
    %622 = vmatpush1.msra.mxu0 0.0
    %623 = vmatprep.subr.mxu0 0.0
    %624 = vmatpush1.msra.mxu0 0.0
    %625 = vmatprep.subr.mxu0 0.0
    %626 = vmatpush1.msra.mxu0 0.0
    %627 = vmatprep.subr.mxu0 0.0
    %628 = vmatpush1.msra.mxu0 0.0
    %629 = vmatprep.subr.mxu0 0.0
    %630 = vmatpush1.msra.mxu0 0.0
    %631 = vmatprep.subr.mxu0 0.0
    %632 = vmatpush1.msra.mxu0 0.0
    %633 = vmatprep.subr.mxu0 0.0
    %634 = vmatpush1.msra.mxu0 0.0
    %635 = vmatprep.subr.mxu0 0.0
    %636 = vmatpush1.msra.mxu0 0.0
    %637 = vmatprep.subr.mxu0 0.0
    %638 = vmatpush1.msra.mxu0 0.0
    %639 = vmatprep.subr.mxu0 0.0
    %640 = vmatpush1.msra.mxu0 0.0
    %641 = vmatprep.subr.mxu0 0.0
    %642 = vmatpush1.msra.mxu0 0.0
    %643 = vmatprep.subr.mxu0 0.0
    %644 = vmatpush1.msra.mxu0 0.0
    %645 = vmatprep.subr.mxu0 0.0
    %646 = vmatpush1.msra.mxu0 0.0
    %647 = vmatprep.subr.mxu0 0.0
    %648 = vmatpush1.msra.mxu0 0.0
    %649 = vmatprep.mubr.f32.mxu0 0.0
    %650 = vmatmul.mubr.f32.gmra.mrb[0].mxu0 %v580
    %v651 = vpop.f32.mrb[0].mxu0
    %v652 = vadd.f32 0.0, %v651
    %v653 = vpop.f32.mrb[0].mxu0
    %654 = vmatprep.mubr.f32.mxu0 0.0
    %655 = vmatmul.mubr.f32.gmra.mrb[0].mxu0 %v583
    %v656 = vpop.f32.mrb[0].mxu0
    %v657 = vadd.f32 0.0, %v656
    %v658 = vpop.f32.mrb[0].mxu0
    %659 = vdwg.mxu0
    %v661 = vsel %vm183, %v371, 0
    %v664 = vsel %vm183, %v376, 0
    %666 = vmatprep.subr.mxu0 0.0
    %667 = vmatpush1.msra.mxu0 %v34
    %668 = vmatprep.subr.mxu0 0.0
    %669 = vmatpush1.msra.mxu0 0.0
    %670 = vmatprep.subr.mxu0 0.0
    %671 = vmatpush1.msra.mxu0 0.0
    %672 = vmatprep.subr.mxu0 0.0
    %673 = vmatpush1.msra.mxu0 0.0
    %674 = vmatprep.subr.mxu0 0.0
    %675 = vmatpush1.msra.mxu0 0.0
    %676 = vmatprep.subr.mxu0 0.0
    %677 = vmatpush1.msra.mxu0 0.0
    %678 = vmatprep.subr.mxu0 0.0
    %679 = vmatpush1.msra.mxu0 0.0
    %680 = vmatprep.subr.mxu0 0.0
    %681 = vmatpush1.msra.mxu0 0.0
    %682 = vmatprep.subr.mxu0 0.0
    %683 = vmatpush1.msra.mxu0 0.0
    %684 = vmatprep.subr.mxu0 0.0
    %685 = vmatpush1.msra.mxu0 0.0
    %686 = vmatprep.subr.mxu0 0.0
    %687 = vmatpush1.msra.mxu0 0.0
    %688 = vmatprep.subr.mxu0 0.0
    %689 = vmatpush1.msra.mxu0 0.0
    %690 = vmatprep.subr.mxu0 0.0
    %691 = vmatpush1.msra.mxu0 0.0
    %692 = vmatprep.subr.mxu0 0.0
    %693 = vmatpush1.msra.mxu0 0.0
    %694 = vmatprep.subr.mxu0 0.0
    %695 = vmatpush1.msra.mxu0 0.0
    %696 = vmatprep.subr.mxu0 0.0
    %697 = vmatpush1.msra.mxu0 0.0
    %698 = vmatprep.subr.mxu0 0.0
    %699 = vmatpush1.msra.mxu0 0.0
    %700 = vmatprep.subr.mxu0 0.0
    %701 = vmatpush1.msra.mxu0 0.0
    %702 = vmatprep.subr.mxu0 0.0
    %703 = vmatpush1.msra.mxu0 0.0
    %704 = vmatprep.subr.mxu0 0.0
    %705 = vmatpush1.msra.mxu0 0.0
    %706 = vmatprep.subr.mxu0 0.0
    %707 = vmatpush1.msra.mxu0 0.0
    %708 = vmatprep.subr.mxu0 0.0
    %709 = vmatpush1.msra.mxu0 0.0
    %710 = vmatprep.subr.mxu0 0.0
    %711 = vmatpush1.msra.mxu0 0.0
    %712 = vmatprep.subr.mxu0 0.0
    %713 = vmatpush1.msra.mxu0 0.0
    %714 = vmatprep.subr.mxu0 0.0
    %715 = vmatpush1.msra.mxu0 0.0
    %716 = vmatprep.subr.mxu0 0.0
    %717 = vmatpush1.msra.mxu0 0.0
    %718 = vmatprep.subr.mxu0 0.0
    %719 = vmatpush1.msra.mxu0 0.0
    %720 = vmatprep.subr.mxu0 0.0
    %721 = vmatpush1.msra.mxu0 0.0
    %722 = vmatprep.subr.mxu0 0.0
    %723 = vmatpush1.msra.mxu0 0.0
    %724 = vmatprep.subr.mxu0 0.0
    %725 = vmatpush1.msra.mxu0 0.0
    %726 = vmatprep.subr.mxu0 0.0
    %727 = vmatpush1.msra.mxu0 0.0
    %728 = vmatprep.subr.mxu0 0.0
    %729 = vmatpush1.msra.mxu0 0.0
    %730 = vmatprep.mubr.f32.mxu0 0.0
    %731 = vmatmul.mubr.f32.gmra.mrb[0].mxu0 %v661
    %v732 = vpop.f32.mrb[0].mxu0
    %v733 = vadd.f32 %v652, %v732
    %v734 = vpop.f32.mrb[0].mxu0
    %735 = vmatprep.mubr.f32.mxu0 0.0
    %736 = vmatmul.mubr.f32.gmra.mrb[0].mxu0 %v664
    %v737 = vpop.f32.mrb[0].mxu0
    %v738 = vadd.f32 %v657, %v737
    %v739 = vpop.f32.mrb[0].mxu0
    %740 = vdwg.mxu0
    %741 = vrot.lane.b32.xlu0 %v175, 112
    %v742 = vpop.permute.xlu0 %741
    %743 = vrot.lane.b32.xlu0 %v176, 112
    %v744 = vpop.permute.xlu0 %743
    %745 = vrot.lane.b32.xlu0 %v167, 80
    %v746 = vpop.permute.xlu0 %745
    %747 = vrot.lane.b32.xlu0 %v172, 80
    %v748 = vpop.permute.xlu0 %747
    %v749 = vsel %vm183, %v742, 0
    %v751 = vsel %vm183, %v744, 0
    %v753 = vsel %vm183, %v746, 0
    %v755 = vsel %vm183, %v748, 0
    %757 = vmatprep.subr.mxu0 0.0
    %758 = vmatpush1.xpose.msra.mxu0 %v753
    %759 = vmatprep.subr.mxu0 0.0
    %760 = vmatpush1.xpose.msra.mxu0 %v755
    %761 = vmatprep.subr.mxu0 0.0
    %762 = vmatpush1.xpose.msra.mxu0 0.0
    %763 = vmatprep.subr.mxu0 0.0
    %764 = vmatpush1.xpose.msra.mxu0 0.0
    %765 = vmatprep.subr.mxu0 0.0
    %766 = vmatpush1.xpose.msra.mxu0 0.0
    %767 = vmatprep.subr.mxu0 0.0
    %768 = vmatpush1.xpose.msra.mxu0 0.0
    %769 = vmatprep.subr.mxu0 0.0
    %770 = vmatpush1.xpose.msra.mxu0 0.0
    %771 = vmatprep.subr.mxu0 0.0
    %772 = vmatpush1.xpose.msra.mxu0 0.0
    %773 = vmatprep.subr.mxu0 0.0
    %774 = vmatpush1.xpose.msra.mxu0 0.0
    %775 = vmatprep.subr.mxu0 0.0
    %776 = vmatpush1.xpose.msra.mxu0 0.0
    %777 = vmatprep.subr.mxu0 0.0
    %778 = vmatpush1.xpose.msra.mxu0 0.0
    %779 = vmatprep.subr.mxu0 0.0
    %780 = vmatpush1.xpose.msra.mxu0 0.0
    %781 = vmatprep.subr.mxu0 0.0
    %782 = vmatpush1.xpose.msra.mxu0 0.0
    %783 = vmatprep.subr.mxu0 0.0
    %784 = vmatpush1.xpose.msra.mxu0 0.0
    %785 = vmatprep.subr.mxu0 0.0
    %786 = vmatpush1.xpose.msra.mxu0 0.0
    %787 = vmatprep.subr.mxu0 0.0
    %788 = vmatpush1.xpose.msra.mxu0 0.0
    %789 = vmatprep.subr.mxu0 0.0
    %790 = vmatpush1.xpose.msra.mxu0 0.0
    %791 = vmatprep.subr.mxu0 0.0
    %792 = vmatpush1.xpose.msra.mxu0 0.0
    %793 = vmatprep.subr.mxu0 0.0
    %794 = vmatpush1.xpose.msra.mxu0 0.0
    %795 = vmatprep.subr.mxu0 0.0
    %796 = vmatpush1.xpose.msra.mxu0 0.0
    %797 = vmatprep.subr.mxu0 0.0
    %798 = vmatpush1.xpose.msra.mxu0 0.0
    %799 = vmatprep.subr.mxu0 0.0
    %800 = vmatpush1.xpose.msra.mxu0 0.0
    %801 = vmatprep.subr.mxu0 0.0
    %802 = vmatpush1.xpose.msra.mxu0 0.0
    %803 = vmatprep.subr.mxu0 0.0
    %804 = vmatpush1.xpose.msra.mxu0 0.0
    %805 = vmatprep.subr.mxu0 0.0
    %806 = vmatpush1.xpose.msra.mxu0 0.0
    %807 = vmatprep.subr.mxu0 0.0
    %808 = vmatpush1.xpose.msra.mxu0 0.0
    %809 = vmatprep.subr.mxu0 0.0
    %810 = vmatpush1.xpose.msra.mxu0 0.0
    %811 = vmatprep.subr.mxu0 0.0
    %812 = vmatpush1.xpose.msra.mxu0 0.0
    %813 = vmatprep.subr.mxu0 0.0
    %814 = vmatpush1.xpose.msra.mxu0 0.0
    %815 = vmatprep.subr.mxu0 0.0
    %816 = vmatpush1.xpose.msra.mxu0 0.0
    %817 = vmatprep.subr.mxu0 0.0
    %818 = vmatpush1.xpose.msra.mxu0 0.0
    %819 = vmatprep.subr.mxu0 0.0
    %820 = vmatpush1.xpose.msra.mxu0 0.0
    %821 = vmatprep.mubr.f32.mxu0 0.0
    %822 = vmatmul.mubr.f32.gmra.mrb[0].mxu0 %v749
    %v823 = vpop.f32.mrb[0].mxu0
    %v824 = vadd.f32 %v32, %v823
    %v825 = vpop.f32.mrb[0].mxu0
    %826 = vmatprep.mubr.f32.mxu0 0.0
    %827 = vmatmul.mubr.f32.gmra.mrb[0].mxu0 %v751
    %v828 = vpop.f32.mrb[0].mxu0
    %v829 = vadd.f32 %v33, %v828
    %v830 = vpop.f32.mrb[0].mxu0
    %831 = vdwg.mxu0
    %v832 = vsel %vm269, %v824, -inf
    %833 = vmax.xlane.f32.xlu0 %v832
    %v834 = vpop.xlane.xlu0 %833
    %v835 = vsel %vm269, %v829, -inf
    %836 = vmax.xlane.f32.xlu0 %v835
    %v837 = vpop.xlane.xlu0 %836
    %v838 = vsub.f32 %v824, %v834
    %v839 = vsub.f32 %v829, %v837
    %v840 = vmul.f32 %v838, 1.442695
    %v841 = vpow.pop %v840
    %v842 = vmul.f32 %v839, 1.442695
    %v843 = vpow.pop %v842
    %v844 = vsel %vm269, %v841, 0.0
    %845 = vadd.xlane.f32.xlu0 %v844
    %v846 = vpop.xlane.xlu0 %845
    %v847 = vsel %vm269, %v843, 0.0
    %848 = vadd.xlane.f32.xlu0 %v847
    %v849 = vpop.xlane.xlu0 %848
    %v850 = vrcp.pop %v846
    %v851 = vrcp.pop %v849
    %v852 = vmul.f32 %v841, %v850
    %v853 = vmul.f32 %v843, %v851
    %854 = vrot.lane.b32.xlu0 %v167, 48
    %v855 = vpop.permute.xlu0 %854
    %856 = vrot.lane.b32.xlu0 %v172, 48
    %v857 = vpop.permute.xlu0 %856
    %v861 = vsel %vm269, %v852, 0
    %v864 = vsel %vm269, %v853, 0
    %866 = vmatprep.subr.mxu0 0.0
    %867 = vmatpush1.msra.mxu0 %v855
    %868 = vmatprep.subr.mxu0 0.0
    %869 = vmatpush1.msra.mxu0 %v857
    %870 = vmatprep.subr.mxu0 0.0
    %871 = vmatpush1.msra.mxu0 0.0
    %872 = vmatprep.subr.mxu0 0.0
    %873 = vmatpush1.msra.mxu0 0.0
    %874 = vmatprep.subr.mxu0 0.0
    %875 = vmatpush1.msra.mxu0 0.0
    %876 = vmatprep.subr.mxu0 0.0
    %877 = vmatpush1.msra.mxu0 0.0
    %878 = vmatprep.subr.mxu0 0.0
    %879 = vmatpush1.msra.mxu0 0.0
    %880 = vmatprep.subr.mxu0 0.0
    %881 = vmatpush1.msra.mxu0 0.0
    %882 = vmatprep.subr.mxu0 0.0
    %883 = vmatpush1.msra.mxu0 0.0
    %884 = vmatprep.subr.mxu0 0.0
    %885 = vmatpush1.msra.mxu0 0.0
    %886 = vmatprep.subr.mxu0 0.0
    %887 = vmatpush1.msra.mxu0 0.0
    %888 = vmatprep.subr.mxu0 0.0
    %889 = vmatpush1.msra.mxu0 0.0
    %890 = vmatprep.subr.mxu0 0.0
    %891 = vmatpush1.msra.mxu0 0.0
    %892 = vmatprep.subr.mxu0 0.0
    %893 = vmatpush1.msra.mxu0 0.0
    %894 = vmatprep.subr.mxu0 0.0
    %895 = vmatpush1.msra.mxu0 0.0
    %896 = vmatprep.subr.mxu0 0.0
    %897 = vmatpush1.msra.mxu0 0.0
    %898 = vmatprep.subr.mxu0 0.0
    %899 = vmatpush1.msra.mxu0 0.0
    %900 = vmatprep.subr.mxu0 0.0
    %901 = vmatpush1.msra.mxu0 0.0
    %902 = vmatprep.subr.mxu0 0.0
    %903 = vmatpush1.msra.mxu0 0.0
    %904 = vmatprep.subr.mxu0 0.0
    %905 = vmatpush1.msra.mxu0 0.0
    %906 = vmatprep.subr.mxu0 0.0
    %907 = vmatpush1.msra.mxu0 0.0
    %908 = vmatprep.subr.mxu0 0.0
    %909 = vmatpush1.msra.mxu0 0.0
    %910 = vmatprep.subr.mxu0 0.0
    %911 = vmatpush1.msra.mxu0 0.0
    %912 = vmatprep.subr.mxu0 0.0
    %913 = vmatpush1.msra.mxu0 0.0
    %914 = vmatprep.subr.mxu0 0.0
    %915 = vmatpush1.msra.mxu0 0.0
    %916 = vmatprep.subr.mxu0 0.0
    %917 = vmatpush1.msra.mxu0 0.0
    %918 = vmatprep.subr.mxu0 0.0
    %919 = vmatpush1.msra.mxu0 0.0
    %920 = vmatprep.subr.mxu0 0.0
    %921 = vmatpush1.msra.mxu0 0.0
    %922 = vmatprep.subr.mxu0 0.0
    %923 = vmatpush1.msra.mxu0 0.0
    %924 = vmatprep.subr.mxu0 0.0
    %925 = vmatpush1.msra.mxu0 0.0
    %926 = vmatprep.subr.mxu0 0.0
    %927 = vmatpush1.msra.mxu0 0.0
    %928 = vmatprep.subr.mxu0 0.0
    %929 = vmatpush1.msra.mxu0 0.0
    %930 = vmatprep.mubr.f32.mxu0 0.0
    %931 = vmatmul.mubr.f32.gmra.mrb[0].mxu0 %v861
    %v932 = vpop.f32.mrb[0].mxu0
    %v933 = vadd.f32 0.0, %v932
    %v934 = vpop.f32.mrb[0].mxu0
    %935 = vmatprep.mubr.f32.mxu0 0.0
    %936 = vmatmul.mubr.f32.gmra.mrb[0].mxu0 %v864
    %v937 = vpop.f32.mrb[0].mxu0
    %v938 = vadd.f32 0.0, %v937
    %v939 = vpop.f32.mrb[0].mxu0
    %940 = vdwg.mxu0
    %v942 = vsel %vm183, %v933, 0
    %v945 = vsel %vm183, %v938, 0
    %947 = vmatprep.subr.mxu0 0.0
    %948 = vmatpush1.msra.mxu0 %v36
    %949 = vmatprep.subr.mxu0 0.0
    %950 = vmatpush1.msra.mxu0 0.0
    %951 = vmatprep.subr.mxu0 0.0
    %952 = vmatpush1.msra.mxu0 0.0
    %953 = vmatprep.subr.mxu0 0.0
    %954 = vmatpush1.msra.mxu0 0.0
    %955 = vmatprep.subr.mxu0 0.0
    %956 = vmatpush1.msra.mxu0 0.0
    %957 = vmatprep.subr.mxu0 0.0
    %958 = vmatpush1.msra.mxu0 0.0
    %959 = vmatprep.subr.mxu0 0.0
    %960 = vmatpush1.msra.mxu0 0.0
    %961 = vmatprep.subr.mxu0 0.0
    %962 = vmatpush1.msra.mxu0 0.0
    %963 = vmatprep.subr.mxu0 0.0
    %964 = vmatpush1.msra.mxu0 0.0
    %965 = vmatprep.subr.mxu0 0.0
    %966 = vmatpush1.msra.mxu0 0.0
    %967 = vmatprep.subr.mxu0 0.0
    %968 = vmatpush1.msra.mxu0 0.0
    %969 = vmatprep.subr.mxu0 0.0
    %970 = vmatpush1.msra.mxu0 0.0
    %971 = vmatprep.subr.mxu0 0.0
    %972 = vmatpush1.msra.mxu0 0.0
    %973 = vmatprep.subr.mxu0 0.0
    %974 = vmatpush1.msra.mxu0 0.0
    %975 = vmatprep.subr.mxu0 0.0
    %976 = vmatpush1.msra.mxu0 0.0
    %977 = vmatprep.subr.mxu0 0.0
    %978 = vmatpush1.msra.mxu0 0.0
    %979 = vmatprep.subr.mxu0 0.0
    %980 = vmatpush1.msra.mxu0 0.0
    %981 = vmatprep.subr.mxu0 0.0
    %982 = vmatpush1.msra.mxu0 0.0
    %983 = vmatprep.subr.mxu0 0.0
    %984 = vmatpush1.msra.mxu0 0.0
    %985 = vmatprep.subr.mxu0 0.0
    %986 = vmatpush1.msra.mxu0 0.0
    %987 = vmatprep.subr.mxu0 0.0
    %988 = vmatpush1.msra.mxu0 0.0
    %989 = vmatprep.subr.mxu0 0.0
    %990 = vmatpush1.msra.mxu0 0.0
    %991 = vmatprep.subr.mxu0 0.0
    %992 = vmatpush1.msra.mxu0 0.0
    %993 = vmatprep.subr.mxu0 0.0
    %994 = vmatpush1.msra.mxu0 0.0
    %995 = vmatprep.subr.mxu0 0.0
    %996 = vmatpush1.msra.mxu0 0.0
    %997 = vmatprep.subr.mxu0 0.0
    %998 = vmatpush1.msra.mxu0 0.0
    %999 = vmatprep.subr.mxu0 0.0
    %1000 = vmatpush1.msra.mxu0 0.0
    %1001 = vmatprep.subr.mxu0 0.0
    %1002 = vmatpush1.msra.mxu0 0.0
    %1003 = vmatprep.subr.mxu0 0.0
    %1004 = vmatpush1.msra.mxu0 0.0
    %1005 = vmatprep.subr.mxu0 0.0
    %1006 = vmatpush1.msra.mxu0 0.0
    %1007 = vmatprep.subr.mxu0 0.0
    %1008 = vmatpush1.msra.mxu0 0.0
    %1009 = vmatprep.subr.mxu0 0.0
    %1010 = vmatpush1.msra.mxu0 0.0
    %1011 = vmatprep.mubr.f32.mxu0 0.0
    %1012 = vmatmul.mubr.f32.gmra.mrb[0].mxu0 %v942
    %v1013 = vpop.f32.mrb[0].mxu0
    %v1014 = vadd.f32 0.0, %v1013
    %v1015 = vpop.f32.mrb[0].mxu0
    %1016 = vmatprep.mubr.f32.mxu0 0.0
    %1017 = vmatmul.mubr.f32.gmra.mrb[0].mxu0 %v945
    %v1018 = vpop.f32.mrb[0].mxu0
    %v1019 = vadd.f32 0.0, %v1018
    %v1020 = vpop.f32.mrb[0].mxu0
    %1021 = vdwg.mxu0
    %v1022 = vadd.f32 %v733, %v1014
    %v1023 = vadd.f32 %v738, %v1019
    %1024 = vrot.lane.b32.xlu0 %v175, 104
    %v1025 = vpop.permute.xlu0 %1024
    %1026 = vrot.lane.b32.xlu0 %v176, 104
    %v1027 = vpop.permute.xlu0 %1026
    %1028 = vrot.lane.b32.xlu0 %v167, 72
    %v1029 = vpop.permute.xlu0 %1028
    %1030 = vrot.lane.b32.xlu0 %v172, 72
    %v1031 = vpop.permute.xlu0 %1030
    %v1032 = vsel %vm183, %v1025, 0
    %v1034 = vsel %vm183, %v1027, 0
    %v1036 = vsel %vm183, %v1029, 0
    %v1038 = vsel %vm183, %v1031, 0
    %1040 = vmatprep.subr.mxu0 0.0
    %1041 = vmatpush1.xpose.msra.mxu0 %v1036
    %1042 = vmatprep.subr.mxu0 0.0
    %1043 = vmatpush1.xpose.msra.mxu0 %v1038
    %1044 = vmatprep.subr.mxu0 0.0
    %1045 = vmatpush1.xpose.msra.mxu0 0.0
    %1046 = vmatprep.subr.mxu0 0.0
    %1047 = vmatpush1.xpose.msra.mxu0 0.0
    %1048 = vmatprep.subr.mxu0 0.0
    %1049 = vmatpush1.xpose.msra.mxu0 0.0
    %1050 = vmatprep.subr.mxu0 0.0
    %1051 = vmatpush1.xpose.msra.mxu0 0.0
    %1052 = vmatprep.subr.mxu0 0.0
    %1053 = vmatpush1.xpose.msra.mxu0 0.0
    %1054 = vmatprep.subr.mxu0 0.0
    %1055 = vmatpush1.xpose.msra.mxu0 0.0
    %1056 = vmatprep.subr.mxu0 0.0
    %1057 = vmatpush1.xpose.msra.mxu0 0.0
    %1058 = vmatprep.subr.mxu0 0.0
    %1059 = vmatpush1.xpose.msra.mxu0 0.0
    %1060 = vmatprep.subr.mxu0 0.0
    %1061 = vmatpush1.xpose.msra.mxu0 0.0
    %1062 = vmatprep.subr.mxu0 0.0
    %1063 = vmatpush1.xpose.msra.mxu0 0.0
    %1064 = vmatprep.subr.mxu0 0.0
    %1065 = vmatpush1.xpose.msra.mxu0 0.0
    %1066 = vmatprep.subr.mxu0 0.0
    %1067 = vmatpush1.xpose.msra.mxu0 0.0
    %1068 = vmatprep.subr.mxu0 0.0
    %1069 = vmatpush1.xpose.msra.mxu0 0.0
    %1070 = vmatprep.subr.mxu0 0.0
    %1071 = vmatpush1.xpose.msra.mxu0 0.0
    %1072 = vmatprep.subr.mxu0 0.0
    %1073 = vmatpush1.xpose.msra.mxu0 0.0
    %1074 = vmatprep.subr.mxu0 0.0
    %1075 = vmatpush1.xpose.msra.mxu0 0.0
    %1076 = vmatprep.subr.mxu0 0.0
    %1077 = vmatpush1.xpose.msra.mxu0 0.0
    %1078 = vmatprep.subr.mxu0 0.0
    %1079 = vmatpush1.xpose.msra.mxu0 0.0
    %1080 = vmatprep.subr.mxu0 0.0
    %1081 = vmatpush1.xpose.msra.mxu0 0.0
    %1082 = vmatprep.subr.mxu0 0.0
    %1083 = vmatpush1.xpose.msra.mxu0 0.0
    %1084 = vmatprep.subr.mxu0 0.0
    %1085 = vmatpush1.xpose.msra.mxu0 0.0
    %1086 = vmatprep.subr.mxu0 0.0
    %1087 = vmatpush1.xpose.msra.mxu0 0.0
    %1088 = vmatprep.subr.mxu0 0.0
    %1089 = vmatpush1.xpose.msra.mxu0 0.0
    %1090 = vmatprep.subr.mxu0 0.0
    %1091 = vmatpush1.xpose.msra.mxu0 0.0
    %1092 = vmatprep.subr.mxu0 0.0
    %1093 = vmatpush1.xpose.msra.mxu0 0.0
    %1094 = vmatprep.subr.mxu0 0.0
    %1095 = vmatpush1.xpose.msra.mxu0 0.0
    %1096 = vmatprep.subr.mxu0 0.0
    %1097 = vmatpush1.xpose.msra.mxu0 0.0
    %1098 = vmatprep.subr.mxu0 0.0
    %1099 = vmatpush1.xpose.msra.mxu0 0.0
    %1100 = vmatprep.subr.mxu0 0.0
    %1101 = vmatpush1.xpose.msra.mxu0 0.0
    %1102 = vmatprep.subr.mxu0 0.0
    %1103 = vmatpush1.xpose.msra.mxu0 0.0
    %1104 = vmatprep.mubr.f32.mxu0 0.0
    %1105 = vmatmul.mubr.f32.gmra.mrb[0].mxu0 %v1032
    %v1106 = vpop.f32.mrb[0].mxu0
    %v1107 = vadd.f32 %v32, %v1106
    %v1108 = vpop.f32.mrb[0].mxu0
    %1109 = vmatprep.mubr.f32.mxu0 0.0
    %1110 = vmatmul.mubr.f32.gmra.mrb[0].mxu0 %v1034
    %v1111 = vpop.f32.mrb[0].mxu0
    %v1112 = vadd.f32 %v33, %v1111
    %v1113 = vpop.f32.mrb[0].mxu0
    %1114 = vdwg.mxu0
    %v1115 = vsel %vm269, %v1107, -inf
    %1116 = vmax.xlane.f32.xlu0 %v1115
    %v1117 = vpop.xlane.xlu0 %1116
    %v1118 = vsel %vm269, %v1112, -inf
    %1119 = vmax.xlane.f32.xlu0 %v1118
    %v1120 = vpop.xlane.xlu0 %1119
    %v1121 = vsub.f32 %v1107, %v1117
    %v1122 = vsub.f32 %v1112, %v1120
    %v1123 = vmul.f32 %v1121, 1.442695
    %v1124 = vpow.pop %v1123
    %v1125 = vmul.f32 %v1122, 1.442695
    %v1126 = vpow.pop %v1125
    %v1127 = vsel %vm269, %v1124, 0.0
    %1128 = vadd.xlane.f32.xlu0 %v1127
    %v1129 = vpop.xlane.xlu0 %1128
    %v1130 = vsel %vm269, %v1126, 0.0
    %1131 = vadd.xlane.f32.xlu0 %v1130
    %v1132 = vpop.xlane.xlu0 %1131
    %v1133 = vrcp.pop %v1129
    %v1134 = vrcp.pop %v1132
    %v1135 = vmul.f32 %v1124, %v1133
    %v1136 = vmul.f32 %v1126, %v1134
    %1137 = vrot.lane.b32.xlu0 %v167, 40
    %v1138 = vpop.permute.xlu0 %1137
    %1139 = vrot.lane.b32.xlu0 %v172, 40
    %v1140 = vpop.permute.xlu0 %1139
    %v1144 = vsel %vm269, %v1135, 0
    %v1147 = vsel %vm269, %v1136, 0
    %1149 = vmatprep.subr.mxu0 0.0
    %1150 = vmatpush1.msra.mxu0 %v1138
    %1151 = vmatprep.subr.mxu0 0.0
    %1152 = vmatpush1.msra.mxu0 %v1140
    %1153 = vmatprep.subr.mxu0 0.0
    %1154 = vmatpush1.msra.mxu0 0.0
    %1155 = vmatprep.subr.mxu0 0.0
    %1156 = vmatpush1.msra.mxu0 0.0
    %1157 = vmatprep.subr.mxu0 0.0
    %1158 = vmatpush1.msra.mxu0 0.0
    %1159 = vmatprep.subr.mxu0 0.0
    %1160 = vmatpush1.msra.mxu0 0.0
    %1161 = vmatprep.subr.mxu0 0.0
    %1162 = vmatpush1.msra.mxu0 0.0
    %1163 = vmatprep.subr.mxu0 0.0
    %1164 = vmatpush1.msra.mxu0 0.0
    %1165 = vmatprep.subr.mxu0 0.0
    %1166 = vmatpush1.msra.mxu0 0.0
    %1167 = vmatprep.subr.mxu0 0.0
    %1168 = vmatpush1.msra.mxu0 0.0
    %1169 = vmatprep.subr.mxu0 0.0
    %1170 = vmatpush1.msra.mxu0 0.0
    %1171 = vmatprep.subr.mxu0 0.0
    %1172 = vmatpush1.msra.mxu0 0.0
    %1173 = vmatprep.subr.mxu0 0.0
    %1174 = vmatpush1.msra.mxu0 0.0
    %1175 = vmatprep.subr.mxu0 0.0
    %1176 = vmatpush1.msra.mxu0 0.0
    %1177 = vmatprep.subr.mxu0 0.0
    %1178 = vmatpush1.msra.mxu0 0.0
    %1179 = vmatprep.subr.mxu0 0.0
    %1180 = vmatpush1.msra.mxu0 0.0
    %1181 = vmatprep.subr.mxu0 0.0
    %1182 = vmatpush1.msra.mxu0 0.0
    %1183 = vmatprep.subr.mxu0 0.0
    %1184 = vmatpush1.msra.mxu0 0.0
    %1185 = vmatprep.subr.mxu0 0.0
    %1186 = vmatpush1.msra.mxu0 0.0
    %1187 = vmatprep.subr.mxu0 0.0
    %1188 = vmatpush1.msra.mxu0 0.0
    %1189 = vmatprep.subr.mxu0 0.0
    %1190 = vmatpush1.msra.mxu0 0.0
    %1191 = vmatprep.subr.mxu0 0.0
    %1192 = vmatpush1.msra.mxu0 0.0
    %1193 = vmatprep.subr.mxu0 0.0
    %1194 = vmatpush1.msra.mxu0 0.0
    %1195 = vmatprep.subr.mxu0 0.0
    %1196 = vmatpush1.msra.mxu0 0.0
    %1197 = vmatprep.subr.mxu0 0.0
    %1198 = vmatpush1.msra.mxu0 0.0
    %1199 = vmatprep.subr.mxu0 0.0
    %1200 = vmatpush1.msra.mxu0 0.0
    %1201 = vmatprep.subr.mxu0 0.0
    %1202 = vmatpush1.msra.mxu0 0.0
    %1203 = vmatprep.subr.mxu0 0.0
    %1204 = vmatpush1.msra.mxu0 0.0
    %1205 = vmatprep.subr.mxu0 0.0
    %1206 = vmatpush1.msra.mxu0 0.0
    %1207 = vmatprep.subr.mxu0 0.0
    %1208 = vmatpush1.msra.mxu0 0.0
    %1209 = vmatprep.subr.mxu0 0.0
    %1210 = vmatpush1.msra.mxu0 0.0
    %1211 = vmatprep.subr.mxu0 0.0
    %1212 = vmatpush1.msra.mxu0 0.0
    %1213 = vmatprep.mubr.f32.mxu0 0.0
    %1214 = vmatmul.mubr.f32.gmra.mrb[0].mxu0 %v1144
    %v1215 = vpop.f32.mrb[0].mxu0
    %v1216 = vadd.f32 0.0, %v1215
    %v1217 = vpop.f32.mrb[0].mxu0
    %1218 = vmatprep.mubr.f32.mxu0 0.0
    %1219 = vmatmul.mubr.f32.gmra.mrb[0].mxu0 %v1147
    %v1220 = vpop.f32.mrb[0].mxu0
    %v1221 = vadd.f32 0.0, %v1220
    %v1222 = vpop.f32.mrb[0].mxu0
    %1223 = vdwg.mxu0
    %v1225 = vsel %vm183, %v1216, 0
    %v1228 = vsel %vm183, %v1221, 0
    %1230 = vmatprep.subr.mxu0 0.0
    %1231 = vmatpush1.msra.mxu0 %v37
    %1232 = vmatprep.subr.mxu0 0.0
    %1233 = vmatpush1.msra.mxu0 0.0
    %1234 = vmatprep.subr.mxu0 0.0
    %1235 = vmatpush1.msra.mxu0 0.0
    %1236 = vmatprep.subr.mxu0 0.0
    %1237 = vmatpush1.msra.mxu0 0.0
    %1238 = vmatprep.subr.mxu0 0.0
    %1239 = vmatpush1.msra.mxu0 0.0
    %1240 = vmatprep.subr.mxu0 0.0
    %1241 = vmatpush1.msra.mxu0 0.0
    %1242 = vmatprep.subr.mxu0 0.0
    %1243 = vmatpush1.msra.mxu0 0.0
    %1244 = vmatprep.subr.mxu0 0.0
    %1245 = vmatpush1.msra.mxu0 0.0
    %1246 = vmatprep.subr.mxu0 0.0
    %1247 = vmatpush1.msra.mxu0 0.0
    %1248 = vmatprep.subr.mxu0 0.0
    %1249 = vmatpush1.msra.mxu0 0.0
    %1250 = vmatprep.subr.mxu0 0.0
    %1251 = vmatpush1.msra.mxu0 0.0
    %1252 = vmatprep.subr.mxu0 0.0
    %1253 = vmatpush1.msra.mxu0 0.0
    %1254 = vmatprep.subr.mxu0 0.0
    %1255 = vmatpush1.msra.mxu0 0.0
    %1256 = vmatprep.subr.mxu0 0.0
    %1257 = vmatpush1.msra.mxu0 0.0
    %1258 = vmatprep.subr.mxu0 0.0
    %1259 = vmatpush1.msra.mxu0 0.0
    %1260 = vmatprep.subr.mxu0 0.0
    %1261 = vmatpush1.msra.mxu0 0.0
    %1262 = vmatprep.subr.mxu0 0.0
    %1263 = vmatpush1.msra.mxu0 0.0
    %1264 = vmatprep.subr.mxu0 0.0
    %1265 = vmatpush1.msra.mxu0 0.0
    %1266 = vmatprep.subr.mxu0 0.0
    %1267 = vmatpush1.msra.mxu0 0.0
    %1268 = vmatprep.subr.mxu0 0.0
    %1269 = vmatpush1.msra.mxu0 0.0
    %1270 = vmatprep.subr.mxu0 0.0
    %1271 = vmatpush1.msra.mxu0 0.0
    %1272 = vmatprep.subr.mxu0 0.0
    %1273 = vmatpush1.msra.mxu0 0.0
    %1274 = vmatprep.subr.mxu0 0.0
    %1275 = vmatpush1.msra.mxu0 0.0
    %1276 = vmatprep.subr.mxu0 0.0
    %1277 = vmatpush1.msra.mxu0 0.0
    %1278 = vmatprep.subr.mxu0 0.0
    %1279 = vmatpush1.msra.mxu0 0.0
    %1280 = vmatprep.subr.mxu0 0.0
    %1281 = vmatpush1.msra.mxu0 0.0
    %1282 = vmatprep.subr.mxu0 0.0
    %1283 = vmatpush1.msra.mxu0 0.0
    %1284 = vmatprep.subr.mxu0 0.0
    %1285 = vmatpush1.msra.mxu0 0.0
    %1286 = vmatprep.subr.mxu0 0.0
    %1287 = vmatpush1.msra.mxu0 0.0
    %1288 = vmatprep.subr.mxu0 0.0
    %1289 = vmatpush1.msra.mxu0 0.0
    %1290 = vmatprep.subr.mxu0 0.0
    %1291 = vmatpush1.msra.mxu0 0.0
    %1292 = vmatprep.subr.mxu0 0.0
    %1293 = vmatpush1.msra.mxu0 0.0
    %1294 = vmatprep.mubr.f32.mxu0 0.0
    %1295 = vmatmul.mubr.f32.gmra.mrb[0].mxu0 %v1225
    %v1296 = vpop.f32.mrb[0].mxu0
    %v1297 = vadd.f32 0.0, %v1296
    %v1298 = vpop.f32.mrb[0].mxu0
    %1299 = vmatprep.mubr.f32.mxu0 0.0
    %1300 = vmatmul.mubr.f32.gmra.mrb[0].mxu0 %v1228
    %v1301 = vpop.f32.mrb[0].mxu0
    %v1302 = vadd.f32 0.0, %v1301
    %v1303 = vpop.f32.mrb[0].mxu0
    %1304 = vdwg.mxu0
    %v1305 = vadd.f32 %v1022, %v1297
    %v1306 = vadd.f32 %v1023, %v1302
    %v1307 = vadd.f32 %v30, %v1305
    %v1308 = vadd.f32 %v31, %v1306
    %v1309 = vld [vmem:[%s5] sm:$0x1]
    %v1311 = vlaneseq
    %v1312 = vshrl.u32 %v1311, 7
    %v1313 = vsub.s32 0, %v1312
    %v1314 = vrot.slane %v1309, %v1313
    %v1316 = vadd.f32 %v1307, %v1314
    %v1317 = vadd.f32 %v1308, %v1314
    %v1318 = vsel %vm57, %v1316, 0.0
    %1319 = vadd.xlane.f32.xlu0 %v1318
    %v1320 = vpop.xlane.xlu0 %1319
    %v1321 = vsel %vm57, %v1317, 0.0
    %1322 = vadd.xlane.f32.xlu0 %v1321
    %v1323 = vpop.xlane.xlu0 %1322
    %v1324 = vrcp.pop 32.0
    %v1325 = vmul.f32 %v1320, %v1324
    %v1326 = vmul.f32 %v1323, %v1324
    %v1327 = vsub.f32 %v1316, %v1325
    %v1328 = vsub.f32 %v1317, %v1326
    %v1329 = vmul.f32 %v1327, %v1327
    %v1330 = vmul.f32 %v1328, %v1328
    %v1331 = vsel %vm57, %v1329, 0.0
    %1332 = vadd.xlane.f32.xlu0 %v1331
    %v1333 = vpop.xlane.xlu0 %1332
    %v1334 = vsel %vm57, %v1330, 0.0
    %1335 = vadd.xlane.f32.xlu0 %v1334
    %v1336 = vpop.xlane.xlu0 %1335
    %v1337 = vmul.f32 %v1333, %v1324
    %v1338 = vmul.f32 %v1336, %v1324
    %v1339 = vadd.f32 %v1337, 1e-05
    %v1340 = vadd.f32 %v1338, 1e-05
    %v1341 = vrsqrt.pop %v1339
    %v1342 = vrsqrt.pop %v1340
    %v1343 = vmul.f32 %v1327, %v1341
    %v1344 = vmul.f32 %v1328, %v1342
    %v1345 = vld [vmem:[%s6] sm:$0x1]
    %v1347 = vlaneseq
    %v1348 = vshrl.u32 %v1347, 7
    %v1349 = vsub.s32 0, %v1348
    %v1350 = vrot.slane %v1345, %v1349
    %v1352 = vmul.f32 %v1343, %v1350
    %v1353 = vmul.f32 %v1344, %v1350
    %v1354 = vld [vmem:[%s7] sm:$0x1]
    %v1356 = vlaneseq
    %v1357 = vshrl.u32 %v1356, 7
    %v1358 = vsub.s32 0, %v1357
    %v1359 = vrot.slane %v1354, %v1358
    %v1361 = vadd.f32 %v1352, %v1359
    %v1362 = vadd.f32 %v1353, %v1359
    %1363 = vst.msk [vmem:[#allocation2] sm:$0xff] %vm57, %v1361
    %1364 = vst.msk [vmem:[#allocation2 + $0x8] sm:$0xff] %vm57, %v1362
    // Predicated region
    $region34: #{tpu_custom_call.1} parent=1 // pred_check
      _
    $region35: #{tpu_custom_call.1} parent=1 // pred_check_branch
      %1366 = sbr.rel (0) target = $region37
    $region36: #{tpu_custom_call.1} parent=1 // pred_region
      %s1368 = ssub.s32 256, 256
      %1369 = vsyncadd [#allocation3], %s1368
      %s1370 = sshll.u32 [#allocation2], 4
      %s1371 = int_to_ptr.vmem [resolvable:$true] %s1370
      %1376 = dma.vmem_to_hbm [thread:$0]  %s1371, 256, %s8, [#allocation3], 128, 128, 8
    $region37: #{tpu_custom_call.1} parent=1 // pred_fallthru
      _
    // Predicated region
    $region38: #{tpu_custom_call.1} parent=1 // pred_check
      _
    $region39: #{tpu_custom_call.1} parent=1 // pred_check_branch
      %1378 = sbr.rel (0) target = $region41
    $region40: #{tpu_custom_call.1} parent=1 // pred_region
      %1379 = dma.done [#allocation3], 256
    $region41: #{tpu_custom_call.1} parent=1 // pred_fallthru
      _
    %1380 = vsyncpa [#allocation3], 1

</llo_original>
